<compile_context>
chip_gen: v7x
topology: tpu7x:2x2x1
jax: 0.10.0
libtpu: 0.0.40
codegen_flags: <defaults>
</compile_context>

<pallas_src>
import functools

import jax
import jax.numpy as jnp
import numpy as np
from jax import lax
from jax.experimental import pallas as pl
from jax.experimental.pallas import tpu as pltpu

NEG_SLOPE = 0.01   # nn.LeakyReLU default
EPS = 1e-5         # nn.InstanceNorm2d default


# ----------------------------------------------------------------------------
# Fused kernel: pool -> conv1(+IN+LReLU) -> conv2(+IN+LReLU) -> convT -> concat
# Processes Nb batch samples per grid step, packed along the lane dim (b, p).
# ----------------------------------------------------------------------------
def _unet_inner_kernel(x_ref, w1_ref, w2_ref, wt_ref, bt_ref,
                       tapm_ref, sseg_ref, msrc_ref, pm_ref, psel_ref,
                       o_ref, img_ref, patch_ref,
                       *, H, W, Cin, Cout, Nb):
    Hh, Wh = H // 2, W // 2
    P = Hh * Wh
    HW = H * W
    NbP = Nb * P
    inv_p = 1.0 / P

    # ---- MaxPool2d(2,2) on the flat channel-major layout, plus the skip copy.
    # pmax[c, q] = max(x[q], x[q+1], x[q+W], x[q+W+1]); the one-hot psel compacts the
    # valid top-left corners to (Cin, P).  Extra channel rows of img stay zero so
    # conv1 (Cin inputs) and conv2 (Cout inputs) share one K=9*Cout im2col path.
    img_ref[...] = jnp.zeros((Cout, NbP), jnp.float32)          # one-vreg init, per step
    for b in range(Nb):
        xb = x_ref[b]                                           # (Cin, HW)
        o_ref[b, 0:Cin, :] = xb                                 # skip branch (lane-dense)
        pmax = jnp.maximum(
            jnp.maximum(xb, pltpu.roll(xb, HW - 1, axis=1)),
            jnp.maximum(pltpu.roll(xb, HW - W, axis=1),
                        pltpu.roll(xb, HW - W - 1, axis=1)))
        img_ref[0:Cin, b * P:(b + 1) * P] = jnp.dot(
            pmax, psel_ref[...], preferred_element_type=jnp.float32)   # (Cin, P)

    seg = sseg_ref[...]                                         # (Nb, NbP) sample indicator

    def conv3x3_in_lrelu(img, w_ref_):
        # roll + mask im2col: patch[(t, c), m] = img[c, m + s_t] where valid, else 0.
        # (cross-sample roll contamination lands only on masked-out positions)
        for t in range(9):
            dy, dx = t // 3 - 1, t % 3 - 1
            s = dy * Wh + dx
            sh = img if s == 0 else pltpu.roll(img, (-s) % NbP, axis=1)
            patch_ref[t * Cout:(t + 1) * Cout, :] = sh * tapm_ref[t:t + 1, :]
        acc = jnp.dot(w_ref_[...], patch_ref[...],
                      preferred_element_type=jnp.float32)        # (Cout, NbP)
        # InstanceNorm2d(affine=False): per-sample mean/var over P columns via segment
        # matmuls on the idle MXU (conv bias omitted: the mean subtraction cancels it).
        mean_s = lax.dot_general(acc, seg, (((1,), (1,)), ((), ())),
                                 preferred_element_type=jnp.float32) * inv_p   # (Cout, Nb)
        mean_f = jnp.dot(mean_s, seg, preferred_element_type=jnp.float32)      # (Cout, NbP)
        cen = acc - mean_f
        var_s = lax.dot_general(cen * cen, seg, (((1,), (1,)), ((), ())),
                                preferred_element_type=jnp.float32) * inv_p
        var_f = jnp.dot(var_s, seg, preferred_element_type=jnp.float32)
        y = cen * lax.rsqrt(var_f + EPS)
        return jnp.where(y >= 0, y, NEG_SLOPE * y)               # LeakyReLU(0.01)

    h1 = conv3x3_in_lrelu(img_ref[...], w1_ref)                  # (Cout, NbP)
    h2 = conv3x3_in_lrelu(h1, w2_ref)                            # (Cout, NbP)

    # ---- ConvTranspose2d(Cout -> Cin, k=2, s=2): all 4 (ki,kj) taps in ONE matmul.
    yall = jnp.dot(wt_ref[...], h2, preferred_element_type=jnp.float32)   # (4*Cin, NbP)

    # ---- depth-to-space: MXU nearest-neighbour upsample (constant one-hot msrc)
    # + VPU parity one-hot select; center_crop is the identity here, so this is the
    # upper half of the fused channel concat.
    for b in range(Nb):
        ups = jnp.dot(yall[:, b * P:(b + 1) * P], msrc_ref[...],
                      preferred_element_type=jnp.float32)        # (4*Cin, HW)
        up = ups[0:Cin, :] * pm_ref[0:1, :]
        for kk in range(1, 4):
            up = up + ups[kk * Cin:(kk + 1) * Cin, :] * pm_ref[kk:kk + 1, :]
        o_ref[b, Cin:2 * Cin, :] = up + bt_ref[...]              # (Cin, HW) + (Cin, 1)


# ----------------------------------------------------------------------------
# Host-side (numpy) compile-time constants: tap validity masks, per-sample segment
# indicator, depth-to-space one-hots, and the maxpool compaction one-hot.
# ----------------------------------------------------------------------------
def _build_constants(H, W, Nb):
    Hh, Wh = H // 2, W // 2
    P, HW = Hh * Wh, H * W
    ih = np.arange(Hh).reshape(Hh, 1)
    jw = np.arange(Wh).reshape(1, Wh)
    tapm = np.zeros((9, Nb * P), np.float32)
    for t in range(9):
        dy, dx = t // 3 - 1, t % 3 - 1
        valid = ((ih + dy >= 0) & (ih + dy < Hh) &
                 (jw + dx >= 0) & (jw + dx < Wh)).astype(np.float32)
        tapm[t] = np.tile(valid.reshape(P), Nb)
    sseg = np.kron(np.eye(Nb, dtype=np.float32), np.ones((1, P), np.float32))   # (Nb, Nb*P)
    q = np.arange(HW)
    r, s = q // W, q % W
    src = (r // 2) * Wh + (s // 2)
    msrc = (np.arange(P)[:, None] == src[None, :]).astype(np.float32)           # (P, HW)
    parity = (r % 2) * 2 + (s % 2)
    pmask = (np.arange(4)[:, None] == parity[None, :]).astype(np.float32)       # (4, HW)
    corner = (2 * (np.arange(P) // Wh)) * W + 2 * (np.arange(P) % Wh)
    psel = (np.arange(HW)[:, None] == corner[None, :]).astype(np.float32)       # (HW, P)
    return tapm, sseg, msrc, pmask, psel


# ----------------------------------------------------------------------------
# Wrapper: NCHW in / NCHW out; only free row-major reshapes outside the kernel.
# ----------------------------------------------------------------------------
def unet_innermost_forward(x_nchw, params):
    N, Cin, H, W = x_nchw.shape
    HW = H * W
    Hh, Wh = H // 2, W // 2
    P = Hh * Wh
    Cout = params["w1"].shape[0]
    assert Cout == 2 * Cin, "innermost block requires out_channels == 2*in_channels"

    # samples per grid step -> MXU row count M = Nb*P (128 for Nb=2, 256 for Nb=4).
    # On v7x with very small even N one may prefer Nb=N//2 so both TensorCores get a step.
    Nb = next(c for c in (4, 2, 1) if N % c == 0)
    NbP = Nb * P

    x_cf = x_nchw.astype(jnp.float32).reshape(N, Cin, HW)        # free reshape

    # weights: conv1 channel-padded to Cout so both convs use one (Cout, 9*Cout) layout.
    w1p = jnp.zeros((Cout, Cout, 3, 3), jnp.float32).at[:, :Cin].set(params["w1"])
    w1_flat = jnp.transpose(w1p, (0, 2, 3, 1)).reshape(Cout, 9 * Cout)
    w2_flat = jnp.transpose(params["w2"], (0, 2, 3, 1)).reshape(Cout, 9 * Cout)
    # ConvT weight (Cout, Cin, 2, 2) -> rows (ki*2+kj)*Cin + ci, cols co.
    wt = jnp.transpose(params["wT"], (2, 3, 1, 0)).reshape(4 * Cin, Cout)
    bt = params["bT"].astype(jnp.float32).reshape(Cin, 1)

    tapm, sseg, msrc, pmask, psel = _build_constants(H, W, Nb)

    kern = functools.partial(_unet_inner_kernel, H=H, W=W, Cin=Cin, Cout=Cout, Nb=Nb)
    cmap = lambda n: (0, 0)                                      # constant-index blocks
    out_flat = pl.pallas_call(
        kern,
        out_shape=jax.ShapeDtypeStruct((N, 2 * Cin, HW), jnp.float32),
        grid=(N // Nb,),
        in_specs=[
            pl.BlockSpec((Nb, Cin, HW), lambda n: (n, 0, 0)),    # x (channel-major slab)
            pl.BlockSpec((Cout, 9 * Cout), cmap),                # w1 (im2col layout)
            pl.BlockSpec((Cout, 9 * Cout), cmap),                # w2
            pl.BlockSpec((4 * Cin, Cout), cmap),                 # wT
            pl.BlockSpec((Cin, 1), cmap),                        # bT
            pl.BlockSpec((9, NbP), cmap),                        # tap validity masks
            pl.BlockSpec((Nb, NbP), cmap),                       # per-sample segment indicator
            pl.BlockSpec((P, HW), cmap),                         # depth-to-space source one-hot
            pl.BlockSpec((4, HW), cmap),                         # parity one-hot masks
            pl.BlockSpec((HW, P), cmap),                         # maxpool compaction one-hot
        ],
        out_specs=pl.BlockSpec((Nb, 2 * Cin, HW), lambda n: (n, 0, 0)),
        scratch_shapes=[pltpu.VMEM((Cout, NbP), jnp.float32),        # pooled image (ch-major)
                        pltpu.VMEM((9 * Cout, NbP), jnp.float32)],   # im2col patch
        compiler_params=pltpu.CompilerParams(
            dimension_semantics=("parallel",)),
    )(x_cf, w1_flat, w2_flat, wt, bt,
      jnp.asarray(tapm), jnp.asarray(sseg), jnp.asarray(msrc),
      jnp.asarray(pmask), jnp.asarray(psel))

    return out_flat.reshape(N, 2 * Cin, H, W)                    # free reshape


# ----------------------------------------------------------------------------
# Pure-JAX reference (PyTorch semantics, NCHW) for the correctness check
# ----------------------------------------------------------------------------
def ref_forward(x, p):
    h = lax.reduce_window(x, -jnp.inf, lax.max, (1, 1, 2, 2), (1, 1, 2, 2), "VALID")

    def contract(h, w, b):
        y = lax.conv_general_dilated(
            h, w, (1, 1), ((1, 1), (1, 1)),
            dimension_numbers=("NCHW", "OIHW", "NCHW"))
        y = y + b[None, :, None, None]
        m = jnp.mean(y, axis=(2, 3), keepdims=True)
        v = jnp.mean((y - m) ** 2, axis=(2, 3), keepdims=True)
        y = (y - m) / jnp.sqrt(v + EPS)
        return jnp.where(y >= 0, y, NEG_SLOPE * y)

    h = contract(h, p["w1"], p["b1"])
    h = contract(h, p["w2"], p["b2"])
    N, _, Hh, Wh = h.shape
    y = jnp.einsum("ncij,cokl->noikjl", h, p["wT"]).reshape(N, p["wT"].shape[1], 2 * Hh, 2 * Wh)
    y = y + p["bT"][None, :, None, None]
    return jnp.concatenate([x, y], axis=1)


if __name__ == "__main__":
    key = jax.random.PRNGKey(0)
    k = jax.random.split(key, 7)

    N, Cin, H, W = 2, 4, 16, 16
    Cout = 2 * Cin  # out_channels = 8 (required so ConvTranspose2d(in*2, in) is consistent)

    x = jax.random.normal(k[0], (N, Cin, H, W), jnp.float32)
    params = {
        "w1": jax.random.normal(k[1], (Cout, Cin, 3, 3), jnp.float32) * 0.1,     # Conv2d(4->8)
        "b1": jax.random.normal(k[2], (Cout,), jnp.float32) * 0.1,               # cancelled by IN
        "w2": jax.random.normal(k[3], (Cout, Cout, 3, 3), jnp.float32) * 0.1,    # Conv2d(8->8)
        "b2": jax.random.normal(k[4], (Cout,), jnp.float32) * 0.1,               # cancelled by IN
        "wT": jax.random.normal(k[5], (2 * Cin, Cin, 2, 2), jnp.float32) * 0.1,  # ConvT(8->4)
        "bT": jax.random.normal(k[6], (Cin,), jnp.float32) * 0.1,
    }

    fwd = jax.jit(unet_innermost_forward)
    out = jax.block_until_ready(fwd(x, params))
    ref = jax.block_until_ready(ref_forward(x, params))

    assert out.shape == (N, 2 * Cin, H, W), out.shape
    np.testing.assert_allclose(np.asarray(out), np.asarray(ref), rtol=5e-4, atol=5e-4)

    # TODO(synk): outermost/middle variants need an externally-supplied `submodule`
    # and Dropout2d (drop_prob > 0); only the self-contained innermost branch is built here.
    print("KERNEL_OK")
</pallas_src>

<mosaic_0001>
module attributes {stable_mosaic.version = 11 : i64} {
  func.func @_unet_inner_kernel(%arg0: i32, %arg1: memref<2x4x256xf32, #tpu.memory_space<vmem>>, %arg2: memref<8x72xf32, #tpu.memory_space<vmem>>, %arg3: memref<8x72xf32, #tpu.memory_space<vmem>>, %arg4: memref<16x8xf32, #tpu.memory_space<vmem>>, %arg5: memref<4x1xf32, #tpu.memory_space<vmem>>, %arg6: memref<9x128xf32, #tpu.memory_space<vmem>>, %arg7: memref<2x128xf32, #tpu.memory_space<vmem>>, %arg8: memref<64x256xf32, #tpu.memory_space<vmem>>, %arg9: memref<4x256xf32, #tpu.memory_space<vmem>>, %arg10: memref<256x64xf32, #tpu.memory_space<vmem>>, %arg11: memref<2x8x256xf32, #tpu.memory_space<vmem>>, %arg12: memref<8x128xf32, #tpu.memory_space<vmem>>, %arg13: memref<72x128xf32, #tpu.memory_space<vmem>>) attributes {dimension_semantics = [#tpu.dimension_semantics<parallel>], iteration_bounds = array<i64: 1>, scalar_prefetch = 0 : i64, scratch_operands = 2 : i64, tpu.core_type = #tpu.core_type<tc>, window_params = [{transform_indices = @transform_0, window_bounds = array<i64: 2, 4, 256>}, {pipeline_mode = #tpu.pipeline_mode<synchronous>, transform_indices = @transform_1, window_bounds = array<i64: 8, 72>}, {pipeline_mode = #tpu.pipeline_mode<synchronous>, transform_indices = @transform_2, window_bounds = array<i64: 8, 72>}, {pipeline_mode = #tpu.pipeline_mode<synchronous>, transform_indices = @transform_3, window_bounds = array<i64: 16, 8>}, {pipeline_mode = #tpu.pipeline_mode<synchronous>, transform_indices = @transform_4, window_bounds = array<i64: 4, 1>}, {pipeline_mode = #tpu.pipeline_mode<synchronous>, transform_indices = @transform_5, window_bounds = array<i64: 9, 128>}, {pipeline_mode = #tpu.pipeline_mode<synchronous>, transform_indices = @transform_6, window_bounds = array<i64: 2, 128>}, {pipeline_mode = #tpu.pipeline_mode<synchronous>, transform_indices = @transform_7, window_bounds = array<i64: 64, 256>}, {pipeline_mode = #tpu.pipeline_mode<synchronous>, transform_indices = @transform_8, window_bounds = array<i64: 4, 256>}, {pipeline_mode = #tpu.pipeline_mode<synchronous>, transform_indices = @transform_9, window_bounds = array<i64: 256, 64>}, {transform_indices = @transform_10, window_bounds = array<i64: 2, 8, 256>}]} {
    %cst = arith.constant 0.000000e+00 : f32
    %0 = vector.broadcast %cst : f32 to vector<8x128xf32>
    %c0 = arith.constant 0 : index
    %c0_0 = arith.constant 0 : index
    %1 = vector.load %arg12[%c0, %c0_0] : memref<8x128xf32, #tpu.memory_space<vmem>>, vector<8x128xf32>
    tpu.vector_store %arg12[%c0, %c0_0], %0 {strides = array<i32>} : memref<8x128xf32, #tpu.memory_space<vmem>>, vector<8x128xf32>,
    %c0_1 = arith.constant 0 : index
    %c0_2 = arith.constant 0 : index
    %c0_3 = arith.constant 0 : index
    %2 = vector.load %arg1[%c0_1, %c0_2, %c0_3] : memref<2x4x256xf32, #tpu.memory_space<vmem>>, vector<1x4x256xf32>
    %3 = vector.shape_cast %2 : vector<1x4x256xf32> to vector<4x256xf32>
    %c0_4 = arith.constant 0 : index
    %c0_5 = arith.constant 0 : index
    %c0_6 = arith.constant 0 : index
    %4 = vector.load %arg11[%c0_4, %c0_5, %c0_6] : memref<2x8x256xf32, #tpu.memory_space<vmem>>, vector<1x4x256xf32>
    %5 = vector.shape_cast %4 : vector<1x4x256xf32> to vector<4x256xf32>
    %6 = vector.shape_cast %3 : vector<4x256xf32> to vector<1x4x256xf32>
    tpu.vector_store %arg11[%c0_4, %c0_5, %c0_6], %6 {strides = array<i32>} : memref<2x8x256xf32, #tpu.memory_space<vmem>>, vector<1x4x256xf32>,
    %c255_i32 = arith.constant 255 : i32
    %7 = tpu.dynamic_rotate %3 by %c255_i32 dim 1 : vector<4x256xf32>, i32 -> vector<4x256xf32>
    %8 = arith.maximumf %3, %7 : vector<4x256xf32>
    %c240_i32 = arith.constant 240 : i32
    %9 = tpu.dynamic_rotate %3 by %c240_i32 dim 1 : vector<4x256xf32>, i32 -> vector<4x256xf32>
    %c239_i32 = arith.constant 239 : i32
    %10 = tpu.dynamic_rotate %3 by %c239_i32 dim 1 : vector<4x256xf32>, i32 -> vector<4x256xf32>
    %11 = arith.maximumf %9, %10 : vector<4x256xf32>
    %12 = arith.maximumf %8, %11 : vector<4x256xf32>
    %c0_7 = arith.constant 0 : index
    %c0_8 = arith.constant 0 : index
    %13 = vector.load %arg10[%c0_7, %c0_8] : memref<256x64xf32, #tpu.memory_space<vmem>>, vector<256x64xf32>
    %cst_9 = arith.constant dense<0.000000e+00> : vector<4x64xf32>
    %14 = tpu.matmul %12, %13, %cst_9 {dimension_numbers = #tpu.dot_dimension_numbers<[1], [0], [0], [1], [0, 0, 1, 1], [], []>} : vector<4x256xf32>, vector<256x64xf32>, vector<4x64xf32> -> vector<4x64xf32>
    %c0_10 = arith.constant 0 : index
    %c0_11 = arith.constant 0 : index
    %15 = vector.load %arg12[%c0_10, %c0_11] : memref<8x128xf32, #tpu.memory_space<vmem>>, vector<4x64xf32>
    tpu.vector_store %arg12[%c0_10, %c0_11], %14 {strides = array<i32>} : memref<8x128xf32, #tpu.memory_space<vmem>>, vector<4x64xf32>,
    %c1 = arith.constant 1 : index
    %c0_12 = arith.constant 0 : index
    %c0_13 = arith.constant 0 : index
    %16 = vector.load %arg1[%c1, %c0_12, %c0_13] : memref<2x4x256xf32, #tpu.memory_space<vmem>>, vector<1x4x256xf32>
    %17 = vector.shape_cast %16 : vector<1x4x256xf32> to vector<4x256xf32>
    %c1_14 = arith.constant 1 : index
    %c0_15 = arith.constant 0 : index
    %c0_16 = arith.constant 0 : index
    %18 = vector.load %arg11[%c1_14, %c0_15, %c0_16] : memref<2x8x256xf32, #tpu.memory_space<vmem>>, vector<1x4x256xf32>
    %19 = vector.shape_cast %18 : vector<1x4x256xf32> to vector<4x256xf32>
    %20 = vector.shape_cast %17 : vector<4x256xf32> to vector<1x4x256xf32>
    tpu.vector_store %arg11[%c1_14, %c0_15, %c0_16], %20 {strides = array<i32>} : memref<2x8x256xf32, #tpu.memory_space<vmem>>, vector<1x4x256xf32>,
    %c255_i32_17 = arith.constant 255 : i32
    %21 = tpu.dynamic_rotate %17 by %c255_i32_17 dim 1 : vector<4x256xf32>, i32 -> vector<4x256xf32>
    %22 = arith.maximumf %17, %21 : vector<4x256xf32>
    %c240_i32_18 = arith.constant 240 : i32
    %23 = tpu.dynamic_rotate %17 by %c240_i32_18 dim 1 : vector<4x256xf32>, i32 -> vector<4x256xf32>
    %c239_i32_19 = arith.constant 239 : i32
    %24 = tpu.dynamic_rotate %17 by %c239_i32_19 dim 1 : vector<4x256xf32>, i32 -> vector<4x256xf32>
    %25 = arith.maximumf %23, %24 : vector<4x256xf32>
    %26 = arith.maximumf %22, %25 : vector<4x256xf32>
    %c0_20 = arith.constant 0 : index
    %c0_21 = arith.constant 0 : index
    %27 = vector.load %arg10[%c0_20, %c0_21] : memref<256x64xf32, #tpu.memory_space<vmem>>, vector<256x64xf32>
    %cst_22 = arith.constant dense<0.000000e+00> : vector<4x64xf32>
    %28 = tpu.matmul %26, %27, %cst_22 {dimension_numbers = #tpu.dot_dimension_numbers<[1], [0], [0], [1], [0, 0, 1, 1], [], []>} : vector<4x256xf32>, vector<256x64xf32>, vector<4x64xf32> -> vector<4x64xf32>
    %c0_23 = arith.constant 0 : index
    %c64 = arith.constant 64 : index
    %29 = vector.load %arg12[%c0_23, %c64] : memref<8x128xf32, #tpu.memory_space<vmem>>, vector<4x64xf32>
    tpu.vector_store %arg12[%c0_23, %c64], %28 {strides = array<i32>} : memref<8x128xf32, #tpu.memory_space<vmem>>, vector<4x64xf32>,
    %c0_24 = arith.constant 0 : index
    %c0_25 = arith.constant 0 : index
    %30 = vector.load %arg7[%c0_24, %c0_25] : memref<2x128xf32, #tpu.memory_space<vmem>>, vector<2x128xf32>
    %c0_26 = arith.constant 0 : index
    %c0_27 = arith.constant 0 : index
    %31 = vector.load %arg12[%c0_26, %c0_27] : memref<8x128xf32, #tpu.memory_space<vmem>>, vector<8x128xf32>
    %c9_i32 = arith.constant 9 : i32
    %32 = tpu.dynamic_rotate %31 by %c9_i32 dim 1 : vector<8x128xf32>, i32 -> vector<8x128xf32>
    %c0_28 = arith.constant 0 : index
    %c0_29 = arith.constant 0 : index
    %33 = vector.load %arg6[%c0_28, %c0_29] : memref<9x128xf32, #tpu.memory_space<vmem>>, vector<1x128xf32>
    %34 = vector.broadcast %33 : vector<1x128xf32> to vector<8x128xf32>
    %35 = arith.mulf %32, %34 : vector<8x128xf32>
    %c0_30 = arith.constant 0 : index
    %c0_31 = arith.constant 0 : index
    %36 = vector.load %arg13[%c0_30, %c0_31] : memref<72x128xf32, #tpu.memory_space<vmem>>, vector<8x128xf32>
    tpu.vector_store %arg13[%c0_30, %c0_31], %35 {strides = array<i32>} : memref<72x128xf32, #tpu.memory_space<vmem>>, vector<8x128xf32>,
    %c8_i32 = arith.constant 8 : i32
    %37 = tpu.dynamic_rotate %31 by %c8_i32 dim 1 : vector<8x128xf32>, i32 -> vector<8x128xf32>
    %c1_32 = arith.constant 1 : index
    %c0_33 = arith.constant 0 : index
    %38 = vector.load %arg6[%c1_32, %c0_33] : memref<9x128xf32, #tpu.memory_space<vmem>>, vector<1x128xf32>
    %39 = vector.broadcast %38 : vector<1x128xf32> to vector<8x128xf32>
    %40 = arith.mulf %37, %39 : vector<8x128xf32>
    %c8 = arith.constant 8 : index
    %c0_34 = arith.constant 0 : index
    %41 = vector.load %arg13[%c8, %c0_34] : memref<72x128xf32, #tpu.memory_space<vmem>>, vector<8x128xf32>
    tpu.vector_store %arg13[%c8, %c0_34], %40 {strides = array<i32>} : memref<72x128xf32, #tpu.memory_space<vmem>>, vector<8x128xf32>,
    %c7_i32 = arith.constant 7 : i32
    %42 = tpu.dynamic_rotate %31 by %c7_i32 dim 1 : vector<8x128xf32>, i32 -> vector<8x128xf32>
    %c2 = arith.constant 2 : index
    %c0_35 = arith.constant 0 : index
    %43 = vector.load %arg6[%c2, %c0_35] : memref<9x128xf32, #tpu.memory_space<vmem>>, vector<1x128xf32>
    %44 = vector.broadcast %43 : vector<1x128xf32> to vector<8x128xf32>
    %45 = arith.mulf %42, %44 : vector<8x128xf32>
    %c16 = arith.constant 16 : index
    %c0_36 = arith.constant 0 : index
    %46 = vector.load %arg13[%c16, %c0_36] : memref<72x128xf32, #tpu.memory_space<vmem>>, vector<8x128xf32>
    tpu.vector_store %arg13[%c16, %c0_36], %45 {strides = array<i32>} : memref<72x128xf32, #tpu.memory_space<vmem>>, vector<8x128xf32>,
    %c1_i32 = arith.constant 1 : i32
    %47 = tpu.dynamic_rotate %31 by %c1_i32 dim 1 : vector<8x128xf32>, i32 -> vector<8x128xf32>
    %c3 = arith.constant 3 : index
    %c0_37 = arith.constant 0 : index
    %48 = vector.load %arg6[%c3, %c0_37] : memref<9x128xf32, #tpu.memory_space<vmem>>, vector<1x128xf32>
    %49 = vector.broadcast %48 : vector<1x128xf32> to vector<8x128xf32>
    %50 = arith.mulf %47, %49 : vector<8x128xf32>
    %c24 = arith.constant 24 : index
    %c0_38 = arith.constant 0 : index
    %51 = vector.load %arg13[%c24, %c0_38] : memref<72x128xf32, #tpu.memory_space<vmem>>, vector<8x128xf32>
    tpu.vector_store %arg13[%c24, %c0_38], %50 {strides = array<i32>} : memref<72x128xf32, #tpu.memory_space<vmem>>, vector<8x128xf32>,
    %c4 = arith.constant 4 : index
    %c0_39 = arith.constant 0 : index
    %52 = vector.load %arg6[%c4, %c0_39] : memref<9x128xf32, #tpu.memory_space<vmem>>, vector<1x128xf32>
    %53 = vector.broadcast %52 : vector<1x128xf32> to vector<8x128xf32>
    %54 = arith.mulf %31, %53 : vector<8x128xf32>
    %c32 = arith.constant 32 : index
    %c0_40 = arith.constant 0 : index
    %55 = vector.load %arg13[%c32, %c0_40] : memref<72x128xf32, #tpu.memory_space<vmem>>, vector<8x128xf32>
    tpu.vector_store %arg13[%c32, %c0_40], %54 {strides = array<i32>} : memref<72x128xf32, #tpu.memory_space<vmem>>, vector<8x128xf32>,
    %c127_i32 = arith.constant 127 : i32
    %56 = tpu.dynamic_rotate %31 by %c127_i32 dim 1 : vector<8x128xf32>, i32 -> vector<8x128xf32>
    %c5 = arith.constant 5 : index
    %c0_41 = arith.constant 0 : index
    %57 = vector.load %arg6[%c5, %c0_41] : memref<9x128xf32, #tpu.memory_space<vmem>>, vector<1x128xf32>
    %58 = vector.broadcast %57 : vector<1x128xf32> to vector<8x128xf32>
    %59 = arith.mulf %56, %58 : vector<8x128xf32>
    %c40 = arith.constant 40 : index
    %c0_42 = arith.constant 0 : index
    %60 = vector.load %arg13[%c40, %c0_42] : memref<72x128xf32, #tpu.memory_space<vmem>>, vector<8x128xf32>
    tpu.vector_store %arg13[%c40, %c0_42], %59 {strides = array<i32>} : memref<72x128xf32, #tpu.memory_space<vmem>>, vector<8x128xf32>,
    %c121_i32 = arith.constant 121 : i32
    %61 = tpu.dynamic_rotate %31 by %c121_i32 dim 1 : vector<8x128xf32>, i32 -> vector<8x128xf32>
    %c6 = arith.constant 6 : index
    %c0_43 = arith.constant 0 : index
    %62 = vector.load %arg6[%c6, %c0_43] : memref<9x128xf32, #tpu.memory_space<vmem>>, vector<1x128xf32>
    %63 = vector.broadcast %62 : vector<1x128xf32> to vector<8x128xf32>
    %64 = arith.mulf %61, %63 : vector<8x128xf32>
    %c48 = arith.constant 48 : index
    %c0_44 = arith.constant 0 : index
    %65 = vector.load %arg13[%c48, %c0_44] : memref<72x128xf32, #tpu.memory_space<vmem>>, vector<8x128xf32>
    tpu.vector_store %arg13[%c48, %c0_44], %64 {strides = array<i32>} : memref<72x128xf32, #tpu.memory_space<vmem>>, vector<8x128xf32>,
    %c120_i32 = arith.constant 120 : i32
    %66 = tpu.dynamic_rotate %31 by %c120_i32 dim 1 : vector<8x128xf32>, i32 -> vector<8x128xf32>
    %c7 = arith.constant 7 : index
    %c0_45 = arith.constant 0 : index
    %67 = vector.load %arg6[%c7, %c0_45] : memref<9x128xf32, #tpu.memory_space<vmem>>, vector<1x128xf32>
    %68 = vector.broadcast %67 : vector<1x128xf32> to vector<8x128xf32>
    %69 = arith.mulf %66, %68 : vector<8x128xf32>
    %c56 = arith.constant 56 : index
    %c0_46 = arith.constant 0 : index
    %70 = vector.load %arg13[%c56, %c0_46] : memref<72x128xf32, #tpu.memory_space<vmem>>, vector<8x128xf32>
    tpu.vector_store %arg13[%c56, %c0_46], %69 {strides = array<i32>} : memref<72x128xf32, #tpu.memory_space<vmem>>, vector<8x128xf32>,
    %c119_i32 = arith.constant 119 : i32
    %71 = tpu.dynamic_rotate %31 by %c119_i32 dim 1 : vector<8x128xf32>, i32 -> vector<8x128xf32>
    %c8_47 = arith.constant 8 : index
    %c0_48 = arith.constant 0 : index
    %72 = vector.load %arg6[%c8_47, %c0_48] : memref<9x128xf32, #tpu.memory_space<vmem>>, vector<1x128xf32>
    %73 = vector.broadcast %72 : vector<1x128xf32> to vector<8x128xf32>
    %74 = arith.mulf %71, %73 : vector<8x128xf32>
    %c64_49 = arith.constant 64 : index
    %c0_50 = arith.constant 0 : index
    %75 = vector.load %arg13[%c64_49, %c0_50] : memref<72x128xf32, #tpu.memory_space<vmem>>, vector<8x128xf32>
    tpu.vector_store %arg13[%c64_49, %c0_50], %74 {strides = array<i32>} : memref<72x128xf32, #tpu.memory_space<vmem>>, vector<8x128xf32>,
    %c0_51 = arith.constant 0 : index
    %c0_52 = arith.constant 0 : index
    %76 = vector.load %arg2[%c0_51, %c0_52] : memref<8x72xf32, #tpu.memory_space<vmem>>, vector<8x72xf32>
    %c0_53 = arith.constant 0 : index
    %c0_54 = arith.constant 0 : index
    %77 = vector.load %arg13[%c0_53, %c0_54] : memref<72x128xf32, #tpu.memory_space<vmem>>, vector<72x128xf32>
    %cst_55 = arith.constant dense<0.000000e+00> : vector<8x128xf32>
    %78 = tpu.matmul %76, %77, %cst_55 {dimension_numbers = #tpu.dot_dimension_numbers<[1], [0], [0], [1], [0, 0, 1, 1], [], []>} : vector<8x72xf32>, vector<72x128xf32>, vector<8x128xf32> -> vector<8x128xf32>
    %cst_56 = arith.constant dense<0.000000e+00> : vector<8x2xf32>
    %79 = tpu.matmul %78, %30, %cst_56 {dimension_numbers = #tpu.dot_dimension_numbers<[1], [1], [0], [0], [0, 0, 1, 0], [], []>} : vector<8x128xf32>, vector<2x128xf32>, vector<8x2xf32> -> vector<8x2xf32>
    %cst_57 = arith.constant 1.562500e-02 : f32
    %80 = vector.broadcast %cst_57 : f32 to vector<8x2xf32>
    %81 = arith.mulf %79, %80 : vector<8x2xf32>
    %cst_58 = arith.constant dense<0.000000e+00> : vector<8x128xf32>
    %82 = tpu.matmul %81, %30, %cst_58 {dimension_numbers = #tpu.dot_dimension_numbers<[1], [0], [0], [1], [0, 0, 1, 1], [], []>} : vector<8x2xf32>, vector<2x128xf32>, vector<8x128xf32> -> vector<8x128xf32>
    %83 = arith.subf %78, %82 : vector<8x128xf32>
    %84 = arith.mulf %83, %83 : vector<8x128xf32>
    %cst_59 = arith.constant dense<0.000000e+00> : vector<8x2xf32>
    %85 = tpu.matmul %84, %30, %cst_59 {dimension_numbers = #tpu.dot_dimension_numbers<[1], [1], [0], [0], [0, 0, 1, 0], [], []>} : vector<8x128xf32>, vector<2x128xf32>, vector<8x2xf32> -> vector<8x2xf32>
    %cst_60 = arith.constant 1.562500e-02 : f32
    %86 = vector.broadcast %cst_60 : f32 to vector<8x2xf32>
    %87 = arith.mulf %85, %86 : vector<8x2xf32>
    %cst_61 = arith.constant dense<0.000000e+00> : vector<8x128xf32>
    %88 = tpu.matmul %87, %30, %cst_61 {dimension_numbers = #tpu.dot_dimension_numbers<[1], [0], [0], [1], [0, 0, 1, 1], [], []>} : vector<8x2xf32>, vector<2x128xf32>, vector<8x128xf32> -> vector<8x128xf32>
    %cst_62 = arith.constant 9.99999974E-6 : f32
    %89 = vector.broadcast %cst_62 : f32 to vector<8x128xf32>
    %90 = arith.addf %88, %89 : vector<8x128xf32>
    %91 = math.rsqrt %90 : vector<8x128xf32>
    %92 = arith.mulf %83, %91 : vector<8x128xf32>
    %cst_63 = arith.constant 0.000000e+00 : f32
    %93 = vector.broadcast %cst_63 : f32 to vector<8x128xf32>
    %94 = arith.cmpf oge, %92, %93 : vector<8x128xf32>
    %cst_64 = arith.constant 0.00999999977 : f32
    %95 = vector.broadcast %cst_64 : f32 to vector<8x128xf32>
    %96 = arith.mulf %95, %92 : vector<8x128xf32>
    %97 = arith.select %94, %92, %96 : vector<8x128xi1>, vector<8x128xf32>
    %c9_i32_65 = arith.constant 9 : i32
    %98 = tpu.dynamic_rotate %97 by %c9_i32_65 dim 1 : vector<8x128xf32>, i32 -> vector<8x128xf32>
    %c0_66 = arith.constant 0 : index
    %c0_67 = arith.constant 0 : index
    %99 = vector.load %arg6[%c0_66, %c0_67] : memref<9x128xf32, #tpu.memory_space<vmem>>, vector<1x128xf32>
    %100 = vector.broadcast %99 : vector<1x128xf32> to vector<8x128xf32>
    %101 = arith.mulf %98, %100 : vector<8x128xf32>
    %c0_68 = arith.constant 0 : index
    %c0_69 = arith.constant 0 : index
    %102 = vector.load %arg13[%c0_68, %c0_69] : memref<72x128xf32, #tpu.memory_space<vmem>>, vector<8x128xf32>
    tpu.vector_store %arg13[%c0_68, %c0_69], %101 {strides = array<i32>} : memref<72x128xf32, #tpu.memory_space<vmem>>, vector<8x128xf32>,
    %c8_i32_70 = arith.constant 8 : i32
    %103 = tpu.dynamic_rotate %97 by %c8_i32_70 dim 1 : vector<8x128xf32>, i32 -> vector<8x128xf32>
    %c1_71 = arith.constant 1 : index
    %c0_72 = arith.constant 0 : index
    %104 = vector.load %arg6[%c1_71, %c0_72] : memref<9x128xf32, #tpu.memory_space<vmem>>, vector<1x128xf32>
    %105 = vector.broadcast %104 : vector<1x128xf32> to vector<8x128xf32>
    %106 = arith.mulf %103, %105 : vector<8x128xf32>
    %c8_73 = arith.constant 8 : index
    %c0_74 = arith.constant 0 : index
    %107 = vector.load %arg13[%c8_73, %c0_74] : memref<72x128xf32, #tpu.memory_space<vmem>>, vector<8x128xf32>
    tpu.vector_store %arg13[%c8_73, %c0_74], %106 {strides = array<i32>} : memref<72x128xf32, #tpu.memory_space<vmem>>, vector<8x128xf32>,
    %c7_i32_75 = arith.constant 7 : i32
    %108 = tpu.dynamic_rotate %97 by %c7_i32_75 dim 1 : vector<8x128xf32>, i32 -> vector<8x128xf32>
    %c2_76 = arith.constant 2 : index
    %c0_77 = arith.constant 0 : index
    %109 = vector.load %arg6[%c2_76, %c0_77] : memref<9x128xf32, #tpu.memory_space<vmem>>, vector<1x128xf32>
    %110 = vector.broadcast %109 : vector<1x128xf32> to vector<8x128xf32>
    %111 = arith.mulf %108, %110 : vector<8x128xf32>
    %c16_78 = arith.constant 16 : index
    %c0_79 = arith.constant 0 : index
    %112 = vector.load %arg13[%c16_78, %c0_79] : memref<72x128xf32, #tpu.memory_space<vmem>>, vector<8x128xf32>
    tpu.vector_store %arg13[%c16_78, %c0_79], %111 {strides = array<i32>} : memref<72x128xf32, #tpu.memory_space<vmem>>, vector<8x128xf32>,
    %c1_i32_80 = arith.constant 1 : i32
    %113 = tpu.dynamic_rotate %97 by %c1_i32_80 dim 1 : vector<8x128xf32>, i32 -> vector<8x128xf32>
    %c3_81 = arith.constant 3 : index
    %c0_82 = arith.constant 0 : index
    %114 = vector.load %arg6[%c3_81, %c0_82] : memref<9x128xf32, #tpu.memory_space<vmem>>, vector<1x128xf32>
    %115 = vector.broadcast %114 : vector<1x128xf32> to vector<8x128xf32>
    %116 = arith.mulf %113, %115 : vector<8x128xf32>
    %c24_83 = arith.constant 24 : index
    %c0_84 = arith.constant 0 : index
    %117 = vector.load %arg13[%c24_83, %c0_84] : memref<72x128xf32, #tpu.memory_space<vmem>>, vector<8x128xf32>
    tpu.vector_store %arg13[%c24_83, %c0_84], %116 {strides = array<i32>} : memref<72x128xf32, #tpu.memory_space<vmem>>, vector<8x128xf32>,
    %c4_85 = arith.constant 4 : index
    %c0_86 = arith.constant 0 : index
    %118 = vector.load %arg6[%c4_85, %c0_86] : memref<9x128xf32, #tpu.memory_space<vmem>>, vector<1x128xf32>
    %119 = vector.broadcast %118 : vector<1x128xf32> to vector<8x128xf32>
    %120 = arith.mulf %97, %119 : vector<8x128xf32>
    %c32_87 = arith.constant 32 : index
    %c0_88 = arith.constant 0 : index
    %121 = vector.load %arg13[%c32_87, %c0_88] : memref<72x128xf32, #tpu.memory_space<vmem>>, vector<8x128xf32>
    tpu.vector_store %arg13[%c32_87, %c0_88], %120 {strides = array<i32>} : memref<72x128xf32, #tpu.memory_space<vmem>>, vector<8x128xf32>,
    %c127_i32_89 = arith.constant 127 : i32
    %122 = tpu.dynamic_rotate %97 by %c127_i32_89 dim 1 : vector<8x128xf32>, i32 -> vector<8x128xf32>
    %c5_90 = arith.constant 5 : index
    %c0_91 = arith.constant 0 : index
    %123 = vector.load %arg6[%c5_90, %c0_91] : memref<9x128xf32, #tpu.memory_space<vmem>>, vector<1x128xf32>
    %124 = vector.broadcast %123 : vector<1x128xf32> to vector<8x128xf32>
    %125 = arith.mulf %122, %124 : vector<8x128xf32>
    %c40_92 = arith.constant 40 : index
    %c0_93 = arith.constant 0 : index
    %126 = vector.load %arg13[%c40_92, %c0_93] : memref<72x128xf32, #tpu.memory_space<vmem>>, vector<8x128xf32>
    tpu.vector_store %arg13[%c40_92, %c0_93], %125 {strides = array<i32>} : memref<72x128xf32, #tpu.memory_space<vmem>>, vector<8x128xf32>,
    %c121_i32_94 = arith.constant 121 : i32
    %127 = tpu.dynamic_rotate %97 by %c121_i32_94 dim 1 : vector<8x128xf32>, i32 -> vector<8x128xf32>
    %c6_95 = arith.constant 6 : index
    %c0_96 = arith.constant 0 : index
    %128 = vector.load %arg6[%c6_95, %c0_96] : memref<9x128xf32, #tpu.memory_space<vmem>>, vector<1x128xf32>
    %129 = vector.broadcast %128 : vector<1x128xf32> to vector<8x128xf32>
    %130 = arith.mulf %127, %129 : vector<8x128xf32>
    %c48_97 = arith.constant 48 : index
    %c0_98 = arith.constant 0 : index
    %131 = vector.load %arg13[%c48_97, %c0_98] : memref<72x128xf32, #tpu.memory_space<vmem>>, vector<8x128xf32>
    tpu.vector_store %arg13[%c48_97, %c0_98], %130 {strides = array<i32>} : memref<72x128xf32, #tpu.memory_space<vmem>>, vector<8x128xf32>,
    %c120_i32_99 = arith.constant 120 : i32
    %132 = tpu.dynamic_rotate %97 by %c120_i32_99 dim 1 : vector<8x128xf32>, i32 -> vector<8x128xf32>
    %c7_100 = arith.constant 7 : index
    %c0_101 = arith.constant 0 : index
    %133 = vector.load %arg6[%c7_100, %c0_101] : memref<9x128xf32, #tpu.memory_space<vmem>>, vector<1x128xf32>
    %134 = vector.broadcast %133 : vector<1x128xf32> to vector<8x128xf32>
    %135 = arith.mulf %132, %134 : vector<8x128xf32>
    %c56_102 = arith.constant 56 : index
    %c0_103 = arith.constant 0 : index
    %136 = vector.load %arg13[%c56_102, %c0_103] : memref<72x128xf32, #tpu.memory_space<vmem>>, vector<8x128xf32>
    tpu.vector_store %arg13[%c56_102, %c0_103], %135 {strides = array<i32>} : memref<72x128xf32, #tpu.memory_space<vmem>>, vector<8x128xf32>,
    %c119_i32_104 = arith.constant 119 : i32
    %137 = tpu.dynamic_rotate %97 by %c119_i32_104 dim 1 : vector<8x128xf32>, i32 -> vector<8x128xf32>
    %c8_105 = arith.constant 8 : index
    %c0_106 = arith.constant 0 : index
    %138 = vector.load %arg6[%c8_105, %c0_106] : memref<9x128xf32, #tpu.memory_space<vmem>>, vector<1x128xf32>
    %139 = vector.broadcast %138 : vector<1x128xf32> to vector<8x128xf32>
    %140 = arith.mulf %137, %139 : vector<8x128xf32>
    %c64_107 = arith.constant 64 : index
    %c0_108 = arith.constant 0 : index
    %141 = vector.load %arg13[%c64_107, %c0_108] : memref<72x128xf32, #tpu.memory_space<vmem>>, vector<8x128xf32>
    tpu.vector_store %arg13[%c64_107, %c0_108], %140 {strides = array<i32>} : memref<72x128xf32, #tpu.memory_space<vmem>>, vector<8x128xf32>,
    %c0_109 = arith.constant 0 : index
    %c0_110 = arith.constant 0 : index
    %142 = vector.load %arg3[%c0_109, %c0_110] : memref<8x72xf32, #tpu.memory_space<vmem>>, vector<8x72xf32>
    %c0_111 = arith.constant 0 : index
    %c0_112 = arith.constant 0 : index
    %143 = vector.load %arg13[%c0_111, %c0_112] : memref<72x128xf32, #tpu.memory_space<vmem>>, vector<72x128xf32>
    %cst_113 = arith.constant dense<0.000000e+00> : vector<8x128xf32>
    %144 = tpu.matmul %142, %143, %cst_113 {dimension_numbers = #tpu.dot_dimension_numbers<[1], [0], [0], [1], [0, 0, 1, 1], [], []>} : vector<8x72xf32>, vector<72x128xf32>, vector<8x128xf32> -> vector<8x128xf32>
    %cst_114 = arith.constant dense<0.000000e+00> : vector<8x2xf32>
    %145 = tpu.matmul %144, %30, %cst_114 {dimension_numbers = #tpu.dot_dimension_numbers<[1], [1], [0], [0], [0, 0, 1, 0], [], []>} : vector<8x128xf32>, vector<2x128xf32>, vector<8x2xf32> -> vector<8x2xf32>
    %cst_115 = arith.constant 1.562500e-02 : f32
    %146 = vector.broadcast %cst_115 : f32 to vector<8x2xf32>
    %147 = arith.mulf %145, %146 : vector<8x2xf32>
    %cst_116 = arith.constant dense<0.000000e+00> : vector<8x128xf32>
    %148 = tpu.matmul %147, %30, %cst_116 {dimension_numbers = #tpu.dot_dimension_numbers<[1], [0], [0], [1], [0, 0, 1, 1], [], []>} : vector<8x2xf32>, vector<2x128xf32>, vector<8x128xf32> -> vector<8x128xf32>
    %149 = arith.subf %144, %148 : vector<8x128xf32>
    %150 = arith.mulf %149, %149 : vector<8x128xf32>
    %cst_117 = arith.constant dense<0.000000e+00> : vector<8x2xf32>
    %151 = tpu.matmul %150, %30, %cst_117 {dimension_numbers = #tpu.dot_dimension_numbers<[1], [1], [0], [0], [0, 0, 1, 0], [], []>} : vector<8x128xf32>, vector<2x128xf32>, vector<8x2xf32> -> vector<8x2xf32>
    %cst_118 = arith.constant 1.562500e-02 : f32
    %152 = vector.broadcast %cst_118 : f32 to vector<8x2xf32>
    %153 = arith.mulf %151, %152 : vector<8x2xf32>
    %cst_119 = arith.constant dense<0.000000e+00> : vector<8x128xf32>
    %154 = tpu.matmul %153, %30, %cst_119 {dimension_numbers = #tpu.dot_dimension_numbers<[1], [0], [0], [1], [0, 0, 1, 1], [], []>} : vector<8x2xf32>, vector<2x128xf32>, vector<8x128xf32> -> vector<8x128xf32>
    %cst_120 = arith.constant 9.99999974E-6 : f32
    %155 = vector.broadcast %cst_120 : f32 to vector<8x128xf32>
    %156 = arith.addf %154, %155 : vector<8x128xf32>
    %157 = math.rsqrt %156 : vector<8x128xf32>
    %158 = arith.mulf %149, %157 : vector<8x128xf32>
    %cst_121 = arith.constant 0.000000e+00 : f32
    %159 = vector.broadcast %cst_121 : f32 to vector<8x128xf32>
    %160 = arith.cmpf oge, %158, %159 : vector<8x128xf32>
    %cst_122 = arith.constant 0.00999999977 : f32
    %161 = vector.broadcast %cst_122 : f32 to vector<8x128xf32>
    %162 = arith.mulf %161, %158 : vector<8x128xf32>
    %163 = arith.select %160, %158, %162 : vector<8x128xi1>, vector<8x128xf32>
    %c0_123 = arith.constant 0 : index
    %c0_124 = arith.constant 0 : index
    %164 = vector.load %arg4[%c0_123, %c0_124] : memref<16x8xf32, #tpu.memory_space<vmem>>, vector<16x8xf32>
    %cst_125 = arith.constant dense<0.000000e+00> : vector<16x128xf32>
    %165 = tpu.matmul %164, %163, %cst_125 {dimension_numbers = #tpu.dot_dimension_numbers<[1], [0], [0], [1], [0, 0, 1, 1], [], []>} : vector<16x8xf32>, vector<8x128xf32>, vector<16x128xf32> -> vector<16x128xf32>
    %166 = vector.extract_strided_slice %165 {offsets = [0, 0], sizes = [16, 64], strides = [1, 1]} : vector<16x128xf32> to vector<16x64xf32>
    %c0_126 = arith.constant 0 : index
    %c0_127 = arith.constant 0 : index
    %167 = vector.load %arg8[%c0_126, %c0_127] : memref<64x256xf32, #tpu.memory_space<vmem>>, vector<64x256xf32>
    %cst_128 = arith.constant dense<0.000000e+00> : vector<16x256xf32>
    %168 = tpu.matmul %166, %167, %cst_128 {dimension_numbers = #tpu.dot_dimension_numbers<[1], [0], [0], [1], [0, 0, 1, 1], [], []>} : vector<16x64xf32>, vector<64x256xf32>, vector<16x256xf32> -> vector<16x256xf32>
    %169 = vector.extract_strided_slice %168 {offsets = [0, 0], sizes = [4, 256], strides = [1, 1]} : vector<16x256xf32> to vector<4x256xf32>
    %c0_129 = arith.constant 0 : index
    %c0_130 = arith.constant 0 : index
    %170 = vector.load %arg9[%c0_129, %c0_130] : memref<4x256xf32, #tpu.memory_space<vmem>>, vector<1x256xf32>
    %171 = vector.broadcast %170 : vector<1x256xf32> to vector<4x256xf32>
    %172 = arith.mulf %169, %171 : vector<4x256xf32>
    %173 = vector.extract_strided_slice %168 {offsets = [4, 0], sizes = [4, 256], strides = [1, 1]} : vector<16x256xf32> to vector<4x256xf32>
    %c1_131 = arith.constant 1 : index
    %c0_132 = arith.constant 0 : index
    %174 = vector.load %arg9[%c1_131, %c0_132] : memref<4x256xf32, #tpu.memory_space<vmem>>, vector<1x256xf32>
    %175 = vector.broadcast %174 : vector<1x256xf32> to vector<4x256xf32>
    %176 = arith.mulf %173, %175 : vector<4x256xf32>
    %177 = arith.addf %172, %176 : vector<4x256xf32>
    %178 = vector.extract_strided_slice %168 {offsets = [8, 0], sizes = [4, 256], strides = [1, 1]} : vector<16x256xf32> to vector<4x256xf32>
    %c2_133 = arith.constant 2 : index
    %c0_134 = arith.constant 0 : index
    %179 = vector.load %arg9[%c2_133, %c0_134] : memref<4x256xf32, #tpu.memory_space<vmem>>, vector<1x256xf32>
    %180 = vector.broadcast %179 : vector<1x256xf32> to vector<4x256xf32>
    %181 = arith.mulf %178, %180 : vector<4x256xf32>
    %182 = arith.addf %177, %181 : vector<4x256xf32>
    %183 = vector.extract_strided_slice %168 {offsets = [12, 0], sizes = [4, 256], strides = [1, 1]} : vector<16x256xf32> to vector<4x256xf32>
    %c3_135 = arith.constant 3 : index
    %c0_136 = arith.constant 0 : index
    %184 = vector.load %arg9[%c3_135, %c0_136] : memref<4x256xf32, #tpu.memory_space<vmem>>, vector<1x256xf32>
    %185 = vector.broadcast %184 : vector<1x256xf32> to vector<4x256xf32>
    %186 = arith.mulf %183, %185 : vector<4x256xf32>
    %187 = arith.addf %182, %186 : vector<4x256xf32>
    %c0_137 = arith.constant 0 : index
    %c0_138 = arith.constant 0 : index
    %188 = vector.load %arg5[%c0_137, %c0_138] : memref<4x1xf32, #tpu.memory_space<vmem>>, vector<4x1xf32>
    %189 = vector.broadcast %188 : vector<4x1xf32> to vector<4x256xf32>
    %190 = arith.addf %187, %189 : vector<4x256xf32>
    %c0_139 = arith.constant 0 : index
    %c4_140 = arith.constant 4 : index
    %c0_141 = arith.constant 0 : index
    %191 = vector.load %arg11[%c0_139, %c4_140, %c0_141] : memref<2x8x256xf32, #tpu.memory_space<vmem>>, vector<1x4x256xf32>
    %192 = vector.shape_cast %191 : vector<1x4x256xf32> to vector<4x256xf32>
    %193 = vector.shape_cast %190 : vector<4x256xf32> to vector<1x4x256xf32>
    tpu.vector_store %arg11[%c0_139, %c4_140, %c0_141], %193 {strides = array<i32>} : memref<2x8x256xf32, #tpu.memory_space<vmem>>, vector<1x4x256xf32>,
    %194 = vector.extract_strided_slice %165 {offsets = [0, 64], sizes = [16, 64], strides = [1, 1]} : vector<16x128xf32> to vector<16x64xf32>
    %c0_142 = arith.constant 0 : index
    %c0_143 = arith.constant 0 : index
    %195 = vector.load %arg8[%c0_142, %c0_143] : memref<64x256xf32, #tpu.memory_space<vmem>>, vector<64x256xf32>
    %cst_144 = arith.constant dense<0.000000e+00> : vector<16x256xf32>
    %196 = tpu.matmul %194, %195, %cst_144 {dimension_numbers = #tpu.dot_dimension_numbers<[1], [0], [0], [1], [0, 0, 1, 1], [], []>} : vector<16x64xf32>, vector<64x256xf32>, vector<16x256xf32> -> vector<16x256xf32>
    %197 = vector.extract_strided_slice %196 {offsets = [0, 0], sizes = [4, 256], strides = [1, 1]} : vector<16x256xf32> to vector<4x256xf32>
    %c0_145 = arith.constant 0 : index
    %c0_146 = arith.constant 0 : index
    %198 = vector.load %arg9[%c0_145, %c0_146] : memref<4x256xf32, #tpu.memory_space<vmem>>, vector<1x256xf32>
    %199 = vector.broadcast %198 : vector<1x256xf32> to vector<4x256xf32>
    %200 = arith.mulf %197, %199 : vector<4x256xf32>
    %201 = vector.extract_strided_slice %196 {offsets = [4, 0], sizes = [4, 256], strides = [1, 1]} : vector<16x256xf32> to vector<4x256xf32>
    %c1_147 = arith.constant 1 : index
    %c0_148 = arith.constant 0 : index
    %202 = vector.load %arg9[%c1_147, %c0_148] : memref<4x256xf32, #tpu.memory_space<vmem>>, vector<1x256xf32>
    %203 = vector.broadcast %202 : vector<1x256xf32> to vector<4x256xf32>
    %204 = arith.mulf %201, %203 : vector<4x256xf32>
    %205 = arith.addf %200, %204 : vector<4x256xf32>
    %206 = vector.extract_strided_slice %196 {offsets = [8, 0], sizes = [4, 256], strides = [1, 1]} : vector<16x256xf32> to vector<4x256xf32>
    %c2_149 = arith.constant 2 : index
    %c0_150 = arith.constant 0 : index
    %207 = vector.load %arg9[%c2_149, %c0_150] : memref<4x256xf32, #tpu.memory_space<vmem>>, vector<1x256xf32>
    %208 = vector.broadcast %207 : vector<1x256xf32> to vector<4x256xf32>
    %209 = arith.mulf %206, %208 : vector<4x256xf32>
    %210 = arith.addf %205, %209 : vector<4x256xf32>
    %211 = vector.extract_strided_slice %196 {offsets = [12, 0], sizes = [4, 256], strides = [1, 1]} : vector<16x256xf32> to vector<4x256xf32>
    %c3_151 = arith.constant 3 : index
    %c0_152 = arith.constant 0 : index
    %212 = vector.load %arg9[%c3_151, %c0_152] : memref<4x256xf32, #tpu.memory_space<vmem>>, vector<1x256xf32>
    %213 = vector.broadcast %212 : vector<1x256xf32> to vector<4x256xf32>
    %214 = arith.mulf %211, %213 : vector<4x256xf32>
    %215 = arith.addf %210, %214 : vector<4x256xf32>
    %c0_153 = arith.constant 0 : index
    %c0_154 = arith.constant 0 : index
    %216 = vector.load %arg5[%c0_153, %c0_154] : memref<4x1xf32, #tpu.memory_space<vmem>>, vector<4x1xf32>
    %217 = vector.broadcast %216 : vector<4x1xf32> to vector<4x256xf32>
    %218 = arith.addf %215, %217 : vector<4x256xf32>
    %c1_155 = arith.constant 1 : index
    %c4_156 = arith.constant 4 : index
    %c0_157 = arith.constant 0 : index
    %219 = vector.load %arg11[%c1_155, %c4_156, %c0_157] : memref<2x8x256xf32, #tpu.memory_space<vmem>>, vector<1x4x256xf32>
    %220 = vector.shape_cast %219 : vector<1x4x256xf32> to vector<4x256xf32>
    %221 = vector.shape_cast %218 : vector<4x256xf32> to vector<1x4x256xf32>
    tpu.vector_store %arg11[%c1_155, %c4_156, %c0_157], %221 {strides = array<i32>} : memref<2x8x256xf32, #tpu.memory_space<vmem>>, vector<1x4x256xf32>,
    return
  }
  func.func @transform_0(%arg0: i32) -> (i32, i32, i32) {
    %c0_i32 = arith.constant 0 : i32
    %c0_i32_0 = arith.constant 0 : i32
    %c0_i32_1 = arith.constant 0 : i32
    return %arg0, %c0_i32, %c0_i32_0 : i32, i32, i32
  }
  func.func @transform_1(%arg0: i32) -> (i32, i32) {
    %c0_i32 = arith.constant 0 : i32
    %c0_i32_0 = arith.constant 0 : i32
    %c0_i32_1 = arith.constant 0 : i32
    return %c0_i32, %c0_i32_0 : i32, i32
  }
  func.func @transform_2(%arg0: i32) -> (i32, i32) {
    %c0_i32 = arith.constant 0 : i32
    %c0_i32_0 = arith.constant 0 : i32
    %c0_i32_1 = arith.constant 0 : i32
    return %c0_i32, %c0_i32_0 : i32, i32
  }
  func.func @transform_3(%arg0: i32) -> (i32, i32) {
    %c0_i32 = arith.constant 0 : i32
    %c0_i32_0 = arith.constant 0 : i32
    %c0_i32_1 = arith.constant 0 : i32
    return %c0_i32, %c0_i32_0 : i32, i32
  }
  func.func @transform_4(%arg0: i32) -> (i32, i32) {
    %c0_i32 = arith.constant 0 : i32
    %c0_i32_0 = arith.constant 0 : i32
    %c0_i32_1 = arith.constant 0 : i32
    return %c0_i32, %c0_i32_0 : i32, i32
  }
  func.func @transform_5(%arg0: i32) -> (i32, i32) {
    %c0_i32 = arith.constant 0 : i32
    %c0_i32_0 = arith.constant 0 : i32
    %c0_i32_1 = arith.constant 0 : i32
    return %c0_i32, %c0_i32_0 : i32, i32
  }
  func.func @transform_6(%arg0: i32) -> (i32, i32) {
    %c0_i32 = arith.constant 0 : i32
    %c0_i32_0 = arith.constant 0 : i32
    %c0_i32_1 = arith.constant 0 : i32
    return %c0_i32, %c0_i32_0 : i32, i32
  }
  func.func @transform_7(%arg0: i32) -> (i32, i32) {
    %c0_i32 = arith.constant 0 : i32
    %c0_i32_0 = arith.constant 0 : i32
    %c0_i32_1 = arith.constant 0 : i32
    return %c0_i32, %c0_i32_0 : i32, i32
  }
  func.func @transform_8(%arg0: i32) -> (i32, i32) {
    %c0_i32 = arith.constant 0 : i32
    %c0_i32_0 = arith.constant 0 : i32
    %c0_i32_1 = arith.constant 0 : i32
    return %c0_i32, %c0_i32_0 : i32, i32
  }
  func.func @transform_9(%arg0: i32) -> (i32, i32) {
    %c0_i32 = arith.constant 0 : i32
    %c0_i32_0 = arith.constant 0 : i32
    %c0_i32_1 = arith.constant 0 : i32
    return %c0_i32, %c0_i32_0 : i32, i32
  }
  func.func @transform_10(%arg0: i32) -> (i32, i32, i32) {
    %c0_i32 = arith.constant 0 : i32
    %c0_i32_0 = arith.constant 0 : i32
    %c0_i32_1 = arith.constant 0 : i32
    return %arg0, %c0_i32, %c0_i32_0 : i32, i32, i32
  }
}

</mosaic_0001>

<llo_original>
// kernel: unet_innermost_forward.1
$region0: #{unet_innermost_forward.1}
  #allocation0 [shape = 'u32[]', space=smem, size = 0x4, offset = 0x4, fixed_abs, tag = 'smem constant byte address 0x4 - core index']
  #allocation1 [shape = 'u32[144,128]{1,0:T(1,128)}', space=vmem, size = 0x12000, scoped, tag = 'internal scratch']
  #allocation2 [shape = 'f32[8,128]{1,0:T(8,128)}', space=vmem, size = 0x1000, scoped, tag = 'scratch operand']
  #allocation3 [shape = 'f32[72,128]{1,0:T(8,128)}', space=vmem, size = 0x9000, scoped, tag = 'scratch operand']
  %s0 = inlined_call_operand.vmem [shape: f32[2,4,256], index: 0, kind: input, shape index: {}]
  %s1 = inlined_call_operand.vmem [shape: f32[8,72], index: 1, kind: input, shape index: {}]
  %s2 = inlined_call_operand.vmem [shape: f32[8,72], index: 2, kind: input, shape index: {}]
  %s3 = inlined_call_operand.vmem [shape: f32[16,8], index: 3, kind: input, shape index: {}]
  %s4 = inlined_call_operand.vmem [shape: f32[4,1], index: 4, kind: input, shape index: {}]
  %s5 = inlined_call_operand.vmem [shape: f32[9,128], index: 5, kind: input, shape index: {}]
  %s6 = inlined_call_operand.vmem [shape: f32[2,128], index: 6, kind: input, shape index: {}]
  %s7 = inlined_call_operand.vmem [shape: f32[64,256], index: 7, kind: input, shape index: {}]
  %s8 = inlined_call_operand.vmem [shape: f32[4,256], index: 8, kind: input, shape index: {}]
  %s9 = inlined_call_operand.vmem [shape: f32[256,64], index: 9, kind: input, shape index: {}]
  %s10 = inlined_call_operand.vmem [shape: f32[2,8,256], index: 10, kind: output, shape index: {}]
  %s11 = sld [smem:[#allocation0]]
  $region50: #{unet_innermost_forward.1} parent=0
    _
  %s13 = ssub.s32 1, %s11
  %s14 = scalar_select 0, %s13, %s11
  // Predicated region
  $region2: #{unet_innermost_forward.1} parent=0 // pred_check
    _
  $region3: #{unet_innermost_forward.1} parent=0 // pred_check_branch
    %16 = sbr.rel (0) target = $region5
  $region4: #{unet_innermost_forward.1} parent=0 // pred_region
    _
  $region5: #{unet_innermost_forward.1} parent=0 // pred_fallthru
    _
  // Predicated region
  $region6: #{unet_innermost_forward.1} parent=0 // pred_check
    _
  $region7: #{unet_innermost_forward.1} parent=0 // pred_check_branch
    %18 = sbr.rel (0) target = $region9
  $region8: #{unet_innermost_forward.1} parent=0 // pred_region
    _
  $region9: #{unet_innermost_forward.1} parent=0 // pred_fallthru
    _
  // Predicated region
  $region10: #{unet_innermost_forward.1} parent=0 // pred_check
    _
  $region11: #{unet_innermost_forward.1} parent=0 // pred_check_branch
    %20 = sbr.rel (0) target = $region13
  $region12: #{unet_innermost_forward.1} parent=0 // pred_region
    _
  $region13: #{unet_innermost_forward.1} parent=0 // pred_fallthru
    _
  // Predicated region
  $region14: #{unet_innermost_forward.1} parent=0 // pred_check
    _
  $region15: #{unet_innermost_forward.1} parent=0 // pred_check_branch
    %22 = sbr.rel (0) target = $region17
  $region16: #{unet_innermost_forward.1} parent=0 // pred_region
    _
  $region17: #{unet_innermost_forward.1} parent=0 // pred_fallthru
    _
  // Predicated region
  $region18: #{unet_innermost_forward.1} parent=0 // pred_check
    _
  $region19: #{unet_innermost_forward.1} parent=0 // pred_check_branch
    %24 = sbr.rel (0) target = $region21
  $region20: #{unet_innermost_forward.1} parent=0 // pred_region
    _
  $region21: #{unet_innermost_forward.1} parent=0 // pred_fallthru
    _
  // Predicated region
  $region22: #{unet_innermost_forward.1} parent=0 // pred_check
    _
  $region23: #{unet_innermost_forward.1} parent=0 // pred_check_branch
    %26 = sbr.rel (0) target = $region25
  $region24: #{unet_innermost_forward.1} parent=0 // pred_region
    _
  $region25: #{unet_innermost_forward.1} parent=0 // pred_fallthru
    _
  // Predicated region
  $region26: #{unet_innermost_forward.1} parent=0 // pred_check
    _
  $region27: #{unet_innermost_forward.1} parent=0 // pred_check_branch
    %28 = sbr.rel (0) target = $region29
  $region28: #{unet_innermost_forward.1} parent=0 // pred_region
    _
  $region29: #{unet_innermost_forward.1} parent=0 // pred_fallthru
    _
  // Predicated region
  $region30: #{unet_innermost_forward.1} parent=0 // pred_check
    _
  $region31: #{unet_innermost_forward.1} parent=0 // pred_check_branch
    %30 = sbr.rel (0) target = $region33
  $region32: #{unet_innermost_forward.1} parent=0 // pred_region
    _
  $region33: #{unet_innermost_forward.1} parent=0 // pred_fallthru
    _
  // Predicated region
  $region34: #{unet_innermost_forward.1} parent=0 // pred_check
    _
  $region35: #{unet_innermost_forward.1} parent=0 // pred_check_branch
    %32 = sbr.rel (0) target = $region37
  $region36: #{unet_innermost_forward.1} parent=0 // pred_region
    _
  $region37: #{unet_innermost_forward.1} parent=0 // pred_fallthru
    _
  // Predicated region
  $region38: #{unet_innermost_forward.1} parent=0 // pred_check
    _
  $region39: #{unet_innermost_forward.1} parent=0 // pred_check_branch
    %34 = sbr.rel (0) target = $region41
  $region40: #{unet_innermost_forward.1} parent=0 // pred_region
    _
  $region41: #{unet_innermost_forward.1} parent=0 // pred_fallthru
    _
  %35 = vst [vmem:[#allocation2] sm:$0xff] 0.0
  %v36 = vld [vmem:[%s0] sm:$0xff]
  %v38 = vcombine.high %v36, %v36
  %40 = vst [vmem:[%s10] sm:$0xf] %v36
  %41 = vst [vmem:[%s10 + $0x8] sm:$0xf] %v38
  %42 = vrot.lane.b32.xlu0 %v36, 127
  %v43 = vpop.permute.xlu0 %42
  %44 = vrot.lane.b32.xlu0 %v38, 127
  %v45 = vpop.permute.xlu0 %44
  %v46 = vlaneseq
  %v47 = vand.u32 %v46, 127
  %vm48 = vcmp.lt.s32.totalorder %v47, 127
  %v49 = vsel %vm48, %v43, %v45
  %v50 = vsel %vm48, %v45, %v43
  %v53 = vcombine.low %v49, %v50
  %v55 = vmax.f32 %v36, %v53
  %56 = vrot.lane.b32.xlu0 %v36, 112
  %v57 = vpop.permute.xlu0 %56
  %58 = vrot.lane.b32.xlu0 %v38, 112
  %v59 = vpop.permute.xlu0 %58
  %vm60 = vcmp.lt.s32.totalorder %v47, 112
  %v61 = vsel %vm60, %v57, %v59
  %v62 = vsel %vm60, %v59, %v57
  %63 = vrot.lane.b32.xlu0 %v36, 111
  %v64 = vpop.permute.xlu0 %63
  %65 = vrot.lane.b32.xlu0 %v38, 111
  %v66 = vpop.permute.xlu0 %65
  %vm67 = vcmp.lt.s32.totalorder %v47, 111
  %v68 = vsel %vm67, %v64, %v66
  %v69 = vsel %vm67, %v66, %v64
  %v70 = vmax.f32 %v61, %v68
  %v71 = vmax.f32 %v62, %v69
  %v74 = vcombine.low %v70, %v71
  %v76 = vmax.f32 %v55, %v74
  %v77 = vld [vmem:[%s9] sm:$0xff]
  %v78 = vld [vmem:[%s9 + $0x8] sm:$0xff]
  %v79 = vld [vmem:[%s9 + $0x10] sm:$0xff]
  %v80 = vld [vmem:[%s9 + $0x18] sm:$0xff]
  %v81 = vld [vmem:[%s9 + $0x20] sm:$0xff]
  %v82 = vld [vmem:[%s9 + $0x28] sm:$0xff]
  %v83 = vld [vmem:[%s9 + $0x30] sm:$0xff]
  %v84 = vld [vmem:[%s9 + $0x38] sm:$0xff]
  %v85 = vld [vmem:[%s9 + $0x40] sm:$0xff]
  %v86 = vld [vmem:[%s9 + $0x48] sm:$0xff]
  %v87 = vld [vmem:[%s9 + $0x50] sm:$0xff]
  %v88 = vld [vmem:[%s9 + $0x58] sm:$0xff]
  %v89 = vld [vmem:[%s9 + $0x60] sm:$0xff]
  %v90 = vld [vmem:[%s9 + $0x68] sm:$0xff]
  %v91 = vld [vmem:[%s9 + $0x70] sm:$0xff]
  %v92 = vld [vmem:[%s9 + $0x78] sm:$0xff]
  %v93 = vld [vmem:[%s9 + $0x80] sm:$0xff]
  %v94 = vld [vmem:[%s9 + $0x88] sm:$0xff]
  %v95 = vld [vmem:[%s9 + $0x90] sm:$0xff]
  %v96 = vld [vmem:[%s9 + $0x98] sm:$0xff]
  %v97 = vld [vmem:[%s9 + $0xa0] sm:$0xff]
  %v98 = vld [vmem:[%s9 + $0xa8] sm:$0xff]
  %v99 = vld [vmem:[%s9 + $0xb0] sm:$0xff]
  %v100 = vld [vmem:[%s9 + $0xb8] sm:$0xff]
  %v101 = vld [vmem:[%s9 + $0xc0] sm:$0xff]
  %v102 = vld [vmem:[%s9 + $0xc8] sm:$0xff]
  %v103 = vld [vmem:[%s9 + $0xd0] sm:$0xff]
  %v104 = vld [vmem:[%s9 + $0xd8] sm:$0xff]
  %v105 = vld [vmem:[%s9 + $0xe0] sm:$0xff]
  %v106 = vld [vmem:[%s9 + $0xe8] sm:$0xff]
  %v107 = vld [vmem:[%s9 + $0xf0] sm:$0xff]
  %v108 = vld [vmem:[%s9 + $0xf8] sm:$0xff]
  %v110 = vcombine.high %v76, %v76
  %112 = vmatprep.subr.mxu0 0.0
  %113 = vmatpush1.msra.mxu0 %v77
  %114 = vmatprep.subr.mxu0 0.0
  %115 = vmatpush1.msra.mxu0 %v78
  %116 = vmatprep.subr.mxu0 0.0
  %117 = vmatpush1.msra.mxu0 %v79
  %118 = vmatprep.subr.mxu0 0.0
  %119 = vmatpush1.msra.mxu0 %v80
  %120 = vmatprep.subr.mxu0 0.0
  %121 = vmatpush1.msra.mxu0 %v81
  %122 = vmatprep.subr.mxu0 0.0
  %123 = vmatpush1.msra.mxu0 %v82
  %124 = vmatprep.subr.mxu0 0.0
  %125 = vmatpush1.msra.mxu0 %v83
  %126 = vmatprep.subr.mxu0 0.0
  %127 = vmatpush1.msra.mxu0 %v84
  %128 = vmatprep.subr.mxu0 0.0
  %129 = vmatpush1.msra.mxu0 %v85
  %130 = vmatprep.subr.mxu0 0.0
  %131 = vmatpush1.msra.mxu0 %v86
  %132 = vmatprep.subr.mxu0 0.0
  %133 = vmatpush1.msra.mxu0 %v87
  %134 = vmatprep.subr.mxu0 0.0
  %135 = vmatpush1.msra.mxu0 %v88
  %136 = vmatprep.subr.mxu0 0.0
  %137 = vmatpush1.msra.mxu0 %v89
  %138 = vmatprep.subr.mxu0 0.0
  %139 = vmatpush1.msra.mxu0 %v90
  %140 = vmatprep.subr.mxu0 0.0
  %141 = vmatpush1.msra.mxu0 %v91
  %142 = vmatprep.subr.mxu0 0.0
  %143 = vmatpush1.msra.mxu0 %v92
  %144 = vmatprep.subr.mxu0 0.0
  %145 = vmatpush1.msra.mxu0 %v93
  %146 = vmatprep.subr.mxu0 0.0
  %147 = vmatpush1.msra.mxu0 %v94
  %148 = vmatprep.subr.mxu0 0.0
  %149 = vmatpush1.msra.mxu0 %v95
  %150 = vmatprep.subr.mxu0 0.0
  %151 = vmatpush1.msra.mxu0 %v96
  %152 = vmatprep.subr.mxu0 0.0
  %153 = vmatpush1.msra.mxu0 %v97
  %154 = vmatprep.subr.mxu0 0.0
  %155 = vmatpush1.msra.mxu0 %v98
  %156 = vmatprep.subr.mxu0 0.0
  %157 = vmatpush1.msra.mxu0 %v99
  %158 = vmatprep.subr.mxu0 0.0
  %159 = vmatpush1.msra.mxu0 %v100
  %160 = vmatprep.subr.mxu0 0.0
  %161 = vmatpush1.msra.mxu0 %v101
  %162 = vmatprep.subr.mxu0 0.0
  %163 = vmatpush1.msra.mxu0 %v102
  %164 = vmatprep.subr.mxu0 0.0
  %165 = vmatpush1.msra.mxu0 %v103
  %166 = vmatprep.subr.mxu0 0.0
  %167 = vmatpush1.msra.mxu0 %v104
  %168 = vmatprep.subr.mxu0 0.0
  %169 = vmatpush1.msra.mxu0 %v105
  %170 = vmatprep.subr.mxu0 0.0
  %171 = vmatpush1.msra.mxu0 %v106
  %172 = vmatprep.subr.mxu0 0.0
  %173 = vmatpush1.msra.mxu0 %v107
  %174 = vmatprep.subr.mxu0 0.0
  %175 = vmatpush1.msra.mxu0 %v108
  %176 = vmatprep.mubr.f32.mxu0 %v110
  %177 = vmatmul.mubr.f32.gmra.mrb[0].mxu0 %v76
  %v178 = vpop.f32.mrb[0].mxu0
  %v179 = vadd.f32 0.0, %v178
  %v180 = vpop.f32.mrb[0].mxu0
  %181 = vdwg.mxu0
  %vm182 = vcmask 519168
  %183 = vst.msk [vmem:[#allocation2] sm:$0xf] %vm182, %v179
  %s184 = scalar_lea.vmem %s0, 8
  %v185 = vld [vmem:[%s184] sm:$0xff]
  %v187 = vcombine.high %v185, %v185
  %s189 = scalar_lea.vmem %s10, 16
  %190 = vst [vmem:[%s189] sm:$0xf] %v185
  %191 = vst [vmem:[%s189 + $0x8] sm:$0xf] %v187
  %192 = vrot.lane.b32.xlu0 %v185, 127
  %v193 = vpop.permute.xlu0 %192
  %194 = vrot.lane.b32.xlu0 %v187, 127
  %v195 = vpop.permute.xlu0 %194
  %v196 = vsel %vm48, %v193, %v195
  %v197 = vsel %vm48, %v195, %v193
  %v200 = vcombine.low %v196, %v197
  %v202 = vmax.f32 %v185, %v200
  %203 = vrot.lane.b32.xlu0 %v185, 112
  %v204 = vpop.permute.xlu0 %203
  %205 = vrot.lane.b32.xlu0 %v187, 112
  %v206 = vpop.permute.xlu0 %205
  %v207 = vsel %vm60, %v204, %v206
  %v208 = vsel %vm60, %v206, %v204
  %209 = vrot.lane.b32.xlu0 %v185, 111
  %v210 = vpop.permute.xlu0 %209
  %211 = vrot.lane.b32.xlu0 %v187, 111
  %v212 = vpop.permute.xlu0 %211
  %v213 = vsel %vm67, %v210, %v212
  %v214 = vsel %vm67, %v212, %v210
  %v215 = vmax.f32 %v207, %v213
  %v216 = vmax.f32 %v208, %v214
  %v219 = vcombine.low %v215, %v216
  %v221 = vmax.f32 %v202, %v219
  %v222 = vld [vmem:[%s9] sm:$0xff]
  %v223 = vld [vmem:[%s9 + $0x8] sm:$0xff]
  %v224 = vld [vmem:[%s9 + $0x10] sm:$0xff]
  %v225 = vld [vmem:[%s9 + $0x18] sm:$0xff]
  %v226 = vld [vmem:[%s9 + $0x20] sm:$0xff]
  %v227 = vld [vmem:[%s9 + $0x28] sm:$0xff]
  %v228 = vld [vmem:[%s9 + $0x30] sm:$0xff]
  %v229 = vld [vmem:[%s9 + $0x38] sm:$0xff]
  %v230 = vld [vmem:[%s9 + $0x40] sm:$0xff]
  %v231 = vld [vmem:[%s9 + $0x48] sm:$0xff]
  %v232 = vld [vmem:[%s9 + $0x50] sm:$0xff]
  %v233 = vld [vmem:[%s9 + $0x58] sm:$0xff]
  %v234 = vld [vmem:[%s9 + $0x60] sm:$0xff]
  %v235 = vld [vmem:[%s9 + $0x68] sm:$0xff]
  %v236 = vld [vmem:[%s9 + $0x70] sm:$0xff]
  %v237 = vld [vmem:[%s9 + $0x78] sm:$0xff]
  %v238 = vld [vmem:[%s9 + $0x80] sm:$0xff]
  %v239 = vld [vmem:[%s9 + $0x88] sm:$0xff]
  %v240 = vld [vmem:[%s9 + $0x90] sm:$0xff]
  %v241 = vld [vmem:[%s9 + $0x98] sm:$0xff]
  %v242 = vld [vmem:[%s9 + $0xa0] sm:$0xff]
  %v243 = vld [vmem:[%s9 + $0xa8] sm:$0xff]
  %v244 = vld [vmem:[%s9 + $0xb0] sm:$0xff]
  %v245 = vld [vmem:[%s9 + $0xb8] sm:$0xff]
  %v246 = vld [vmem:[%s9 + $0xc0] sm:$0xff]
  %v247 = vld [vmem:[%s9 + $0xc8] sm:$0xff]
  %v248 = vld [vmem:[%s9 + $0xd0] sm:$0xff]
  %v249 = vld [vmem:[%s9 + $0xd8] sm:$0xff]
  %v250 = vld [vmem:[%s9 + $0xe0] sm:$0xff]
  %v251 = vld [vmem:[%s9 + $0xe8] sm:$0xff]
  %v252 = vld [vmem:[%s9 + $0xf0] sm:$0xff]
  %v253 = vld [vmem:[%s9 + $0xf8] sm:$0xff]
  %v255 = vcombine.high %v221, %v221
  %257 = vmatprep.subr.mxu0 0.0
  %258 = vmatpush1.msra.mxu0 %v222
  %259 = vmatprep.subr.mxu0 0.0
  %260 = vmatpush1.msra.mxu0 %v223
  %261 = vmatprep.subr.mxu0 0.0
  %262 = vmatpush1.msra.mxu0 %v224
  %263 = vmatprep.subr.mxu0 0.0
  %264 = vmatpush1.msra.mxu0 %v225
  %265 = vmatprep.subr.mxu0 0.0
  %266 = vmatpush1.msra.mxu0 %v226
  %267 = vmatprep.subr.mxu0 0.0
  %268 = vmatpush1.msra.mxu0 %v227
  %269 = vmatprep.subr.mxu0 0.0
  %270 = vmatpush1.msra.mxu0 %v228
  %271 = vmatprep.subr.mxu0 0.0
  %272 = vmatpush1.msra.mxu0 %v229
  %273 = vmatprep.subr.mxu0 0.0
  %274 = vmatpush1.msra.mxu0 %v230
  %275 = vmatprep.subr.mxu0 0.0
  %276 = vmatpush1.msra.mxu0 %v231
  %277 = vmatprep.subr.mxu0 0.0
  %278 = vmatpush1.msra.mxu0 %v232
  %279 = vmatprep.subr.mxu0 0.0
  %280 = vmatpush1.msra.mxu0 %v233
  %281 = vmatprep.subr.mxu0 0.0
  %282 = vmatpush1.msra.mxu0 %v234
  %283 = vmatprep.subr.mxu0 0.0
  %284 = vmatpush1.msra.mxu0 %v235
  %285 = vmatprep.subr.mxu0 0.0
  %286 = vmatpush1.msra.mxu0 %v236
  %287 = vmatprep.subr.mxu0 0.0
  %288 = vmatpush1.msra.mxu0 %v237
  %289 = vmatprep.subr.mxu0 0.0
  %290 = vmatpush1.msra.mxu0 %v238
  %291 = vmatprep.subr.mxu0 0.0
  %292 = vmatpush1.msra.mxu0 %v239
  %293 = vmatprep.subr.mxu0 0.0
  %294 = vmatpush1.msra.mxu0 %v240
  %295 = vmatprep.subr.mxu0 0.0
  %296 = vmatpush1.msra.mxu0 %v241
  %297 = vmatprep.subr.mxu0 0.0
  %298 = vmatpush1.msra.mxu0 %v242
  %299 = vmatprep.subr.mxu0 0.0
  %300 = vmatpush1.msra.mxu0 %v243
  %301 = vmatprep.subr.mxu0 0.0
  %302 = vmatpush1.msra.mxu0 %v244
  %303 = vmatprep.subr.mxu0 0.0
  %304 = vmatpush1.msra.mxu0 %v245
  %305 = vmatprep.subr.mxu0 0.0
  %306 = vmatpush1.msra.mxu0 %v246
  %307 = vmatprep.subr.mxu0 0.0
  %308 = vmatpush1.msra.mxu0 %v247
  %309 = vmatprep.subr.mxu0 0.0
  %310 = vmatpush1.msra.mxu0 %v248
  %311 = vmatprep.subr.mxu0 0.0
  %312 = vmatpush1.msra.mxu0 %v249
  %313 = vmatprep.subr.mxu0 0.0
  %314 = vmatpush1.msra.mxu0 %v250
  %315 = vmatprep.subr.mxu0 0.0
  %316 = vmatpush1.msra.mxu0 %v251
  %317 = vmatprep.subr.mxu0 0.0
  %318 = vmatpush1.msra.mxu0 %v252
  %319 = vmatprep.subr.mxu0 0.0
  %320 = vmatpush1.msra.mxu0 %v253
  %321 = vmatprep.mubr.f32.mxu0 %v255
  %322 = vmatmul.mubr.f32.gmra.mrb[0].mxu0 %v221
  %v323 = vpop.f32.mrb[0].mxu0
  %v324 = vadd.f32 0.0, %v323
  %v325 = vpop.f32.mrb[0].mxu0
  %326 = vdwg.mxu0
  %328 = vrot.lane.b32.xlu0 %v324, 64
  %v329 = vpop.permute.xlu0 %328
  %vm331 = vcmask 1043968
  %332 = vst.msk [vmem:[#allocation2] sm:$0xf] %vm331, %v329
  %v333 = vld [vmem:[%s6] sm:$0x3]
  %v334 = vld [vmem:[#allocation2] sm:$0xff]
  %335 = vrot.lane.b32.xlu0 %v334, 9
  %v336 = vpop.permute.xlu0 %335
  %v337 = vld [vmem:[%s5] sm:$0x1]
  %v338 = vlaneseq
  %v339 = vshrl.u32 %v338, 7
  %v340 = vsub.s32 0, %v339
  %v341 = vrot.slane %v337, %v340
  %v342 = vmul.f32 %v336, %v341
  %343 = vst [vmem:[#allocation3] sm:$0xff] %v342
  %344 = vrot.lane.b32.xlu0 %v334, 8
  %v345 = vpop.permute.xlu0 %344
  %v346 = vld [vmem:[%s5 + $0x1] sm:$0x1]
  %v347 = vlaneseq
  %v348 = vshrl.u32 %v347, 7
  %v349 = vsub.s32 0, %v348
  %v350 = vrot.slane %v346, %v349
  %v351 = vmul.f32 %v345, %v350
  %352 = vst [vmem:[#allocation3 + $0x8] sm:$0xff] %v351
  %353 = vrot.lane.b32.xlu0 %v334, 7
  %v354 = vpop.permute.xlu0 %353
  %v355 = vld [vmem:[%s5 + $0x2] sm:$0x1]
  %v356 = vlaneseq
  %v357 = vshrl.u32 %v356, 7
  %v358 = vsub.s32 0, %v357
  %v359 = vrot.slane %v355, %v358
  %v360 = vmul.f32 %v354, %v359
  %361 = vst [vmem:[#allocation3 + $0x10] sm:$0xff] %v360
  %362 = vrot.lane.b32.xlu0 %v334, 1
  %v363 = vpop.permute.xlu0 %362
  %v364 = vld [vmem:[%s5 + $0x3] sm:$0x1]
  %v365 = vlaneseq
  %v366 = vshrl.u32 %v365, 7
  %v367 = vsub.s32 0, %v366
  %v368 = vrot.slane %v364, %v367
  %v369 = vmul.f32 %v363, %v368
  %370 = vst [vmem:[#allocation3 + $0x18] sm:$0xff] %v369
  %v371 = vld [vmem:[%s5 + $0x4] sm:$0x1]
  %v372 = vlaneseq
  %v373 = vshrl.u32 %v372, 7
  %v374 = vsub.s32 0, %v373
  %v375 = vrot.slane %v371, %v374
  %v376 = vmul.f32 %v334, %v375
  %377 = vst [vmem:[#allocation3 + $0x20] sm:$0xff] %v376
  %378 = vrot.lane.b32.xlu0 %v334, 127
  %v379 = vpop.permute.xlu0 %378
  %v380 = vld [vmem:[%s5 + $0x5] sm:$0x1]
  %v381 = vlaneseq
  %v382 = vshrl.u32 %v381, 7
  %v383 = vsub.s32 0, %v382
  %v384 = vrot.slane %v380, %v383
  %v385 = vmul.f32 %v379, %v384
  %386 = vst [vmem:[#allocation3 + $0x28] sm:$0xff] %v385
  %387 = vrot.lane.b32.xlu0 %v334, 121
  %v388 = vpop.permute.xlu0 %387
  %v389 = vld [vmem:[%s5 + $0x6] sm:$0x1]
  %v390 = vlaneseq
  %v391 = vshrl.u32 %v390, 7
  %v392 = vsub.s32 0, %v391
  %v393 = vrot.slane %v389, %v392
  %v394 = vmul.f32 %v388, %v393
  %395 = vst [vmem:[#allocation3 + $0x30] sm:$0xff] %v394
  %396 = vrot.lane.b32.xlu0 %v334, 120
  %v397 = vpop.permute.xlu0 %396
  %v398 = vld [vmem:[%s5 + $0x7] sm:$0x1]
  %v399 = vlaneseq
  %v400 = vshrl.u32 %v399, 7
  %v401 = vsub.s32 0, %v400
  %v402 = vrot.slane %v398, %v401
  %v403 = vmul.f32 %v397, %v402
  %404 = vst [vmem:[#allocation3 + $0x38] sm:$0xff] %v403
  %405 = vrot.lane.b32.xlu0 %v334, 119
  %v406 = vpop.permute.xlu0 %405
  %v407 = vld [vmem:[%s5 + $0x8] sm:$0x1]
  %v408 = vlaneseq
  %v409 = vshrl.u32 %v408, 7
  %v410 = vsub.s32 0, %v409
  %v411 = vrot.slane %v407, %v410
  %v412 = vmul.f32 %v406, %v411
  %413 = vst [vmem:[#allocation3 + $0x40] sm:$0xff] %v412
  %v414 = vld [vmem:[%s1] sm:$0xff]
  %v415 = vld [vmem:[#allocation3] sm:$0xff]
  %v416 = vld [vmem:[#allocation3 + $0x8] sm:$0xff]
  %v417 = vld [vmem:[#allocation3 + $0x10] sm:$0xff]
  %v418 = vld [vmem:[#allocation3 + $0x18] sm:$0xff]
  %v419 = vld [vmem:[#allocation3 + $0x20] sm:$0xff]
  %v420 = vld [vmem:[#allocation3 + $0x28] sm:$0xff]
  %v421 = vld [vmem:[#allocation3 + $0x30] sm:$0xff]
  %v422 = vld [vmem:[#allocation3 + $0x38] sm:$0xff]
  %v423 = vld [vmem:[#allocation3 + $0x40] sm:$0xff]
  %vm424 = vcmask 588800
  %v426 = vsel %vm424, %v414, 0
  %428 = vmatprep.subr.mxu0 0.0
  %429 = vmatpush1.msra.mxu0 %v415
  %430 = vmatprep.subr.mxu0 0.0
  %431 = vmatpush1.msra.mxu0 %v416
  %432 = vmatprep.subr.mxu0 0.0
  %433 = vmatpush1.msra.mxu0 %v417
  %434 = vmatprep.subr.mxu0 0.0
  %435 = vmatpush1.msra.mxu0 %v418
  %436 = vmatprep.subr.mxu0 0.0
  %437 = vmatpush1.msra.mxu0 %v419
  %438 = vmatprep.subr.mxu0 0.0
  %439 = vmatpush1.msra.mxu0 %v420
  %440 = vmatprep.subr.mxu0 0.0
  %441 = vmatpush1.msra.mxu0 %v421
  %442 = vmatprep.subr.mxu0 0.0
  %443 = vmatpush1.msra.mxu0 %v422
  %444 = vmatprep.subr.mxu0 0.0
  %445 = vmatpush1.msra.mxu0 %v423
  %446 = vmatprep.subr.mxu0 0.0
  %447 = vmatpush1.msra.mxu0 0.0
  %448 = vmatprep.subr.mxu0 0.0
  %449 = vmatpush1.msra.mxu0 0.0
  %450 = vmatprep.subr.mxu0 0.0
  %451 = vmatpush1.msra.mxu0 0.0
  %452 = vmatprep.subr.mxu0 0.0
  %453 = vmatpush1.msra.mxu0 0.0
  %454 = vmatprep.subr.mxu0 0.0
  %455 = vmatpush1.msra.mxu0 0.0
  %456 = vmatprep.subr.mxu0 0.0
  %457 = vmatpush1.msra.mxu0 0.0
  %458 = vmatprep.subr.mxu0 0.0
  %459 = vmatpush1.msra.mxu0 0.0
  %460 = vmatprep.subr.mxu0 0.0
  %461 = vmatpush1.msra.mxu0 0.0
  %462 = vmatprep.subr.mxu0 0.0
  %463 = vmatpush1.msra.mxu0 0.0
  %464 = vmatprep.subr.mxu0 0.0
  %465 = vmatpush1.msra.mxu0 0.0
  %466 = vmatprep.subr.mxu0 0.0
  %467 = vmatpush1.msra.mxu0 0.0
  %468 = vmatprep.subr.mxu0 0.0
  %469 = vmatpush1.msra.mxu0 0.0
  %470 = vmatprep.subr.mxu0 0.0
  %471 = vmatpush1.msra.mxu0 0.0
  %472 = vmatprep.subr.mxu0 0.0
  %473 = vmatpush1.msra.mxu0 0.0
  %474 = vmatprep.subr.mxu0 0.0
  %475 = vmatpush1.msra.mxu0 0.0
  %476 = vmatprep.subr.mxu0 0.0
  %477 = vmatpush1.msra.mxu0 0.0
  %478 = vmatprep.subr.mxu0 0.0
  %479 = vmatpush1.msra.mxu0 0.0
  %480 = vmatprep.subr.mxu0 0.0
  %481 = vmatpush1.msra.mxu0 0.0
  %482 = vmatprep.subr.mxu0 0.0
  %483 = vmatpush1.msra.mxu0 0.0
  %484 = vmatprep.subr.mxu0 0.0
  %485 = vmatpush1.msra.mxu0 0.0
  %486 = vmatprep.subr.mxu0 0.0
  %487 = vmatpush1.msra.mxu0 0.0
  %488 = vmatprep.subr.mxu0 0.0
  %489 = vmatpush1.msra.mxu0 0.0
  %490 = vmatprep.subr.mxu0 0.0
  %491 = vmatpush1.msra.mxu0 0.0
  %492 = vmatprep.mubr.f32.mxu0 0.0
  %493 = vmatmul.mubr.f32.gmra.mrb[0].mxu0 %v426
  %v494 = vpop.f32.mrb[0].mxu0
  %v495 = vadd.f32 0.0, %v494
  %v496 = vpop.f32.mrb[0].mxu0
  %497 = vdwg.mxu0
  %498 = vmatprep.subr.mxu0 0.0
  %499 = vmatpush1.xpose.msra.mxu0 %v333
  %500 = vmatprep.subr.mxu0 0.0
  %501 = vmatpush1.xpose.msra.mxu0 0.0
  %502 = vmatprep.subr.mxu0 0.0
  %503 = vmatpush1.xpose.msra.mxu0 0.0
  %504 = vmatprep.subr.mxu0 0.0
  %505 = vmatpush1.xpose.msra.mxu0 0.0
  %506 = vmatprep.subr.mxu0 0.0
  %507 = vmatpush1.xpose.msra.mxu0 0.0
  %508 = vmatprep.subr.mxu0 0.0
  %509 = vmatpush1.xpose.msra.mxu0 0.0
  %510 = vmatprep.subr.mxu0 0.0
  %511 = vmatpush1.xpose.msra.mxu0 0.0
  %512 = vmatprep.subr.mxu0 0.0
  %513 = vmatpush1.xpose.msra.mxu0 0.0
  %514 = vmatprep.subr.mxu0 0.0
  %515 = vmatpush1.xpose.msra.mxu0 0.0
  %516 = vmatprep.subr.mxu0 0.0
  %517 = vmatpush1.xpose.msra.mxu0 0.0
  %518 = vmatprep.subr.mxu0 0.0
  %519 = vmatpush1.xpose.msra.mxu0 0.0
  %520 = vmatprep.subr.mxu0 0.0
  %521 = vmatpush1.xpose.msra.mxu0 0.0
  %522 = vmatprep.subr.mxu0 0.0
  %523 = vmatpush1.xpose.msra.mxu0 0.0
  %524 = vmatprep.subr.mxu0 0.0
  %525 = vmatpush1.xpose.msra.mxu0 0.0
  %526 = vmatprep.subr.mxu0 0.0
  %527 = vmatpush1.xpose.msra.mxu0 0.0
  %528 = vmatprep.subr.mxu0 0.0
  %529 = vmatpush1.xpose.msra.mxu0 0.0
  %530 = vmatprep.subr.mxu0 0.0
  %531 = vmatpush1.xpose.msra.mxu0 0.0
  %532 = vmatprep.subr.mxu0 0.0
  %533 = vmatpush1.xpose.msra.mxu0 0.0
  %534 = vmatprep.subr.mxu0 0.0
  %535 = vmatpush1.xpose.msra.mxu0 0.0
  %536 = vmatprep.subr.mxu0 0.0
  %537 = vmatpush1.xpose.msra.mxu0 0.0
  %538 = vmatprep.subr.mxu0 0.0
  %539 = vmatpush1.xpose.msra.mxu0 0.0
  %540 = vmatprep.subr.mxu0 0.0
  %541 = vmatpush1.xpose.msra.mxu0 0.0
  %542 = vmatprep.subr.mxu0 0.0
  %543 = vmatpush1.xpose.msra.mxu0 0.0
  %544 = vmatprep.subr.mxu0 0.0
  %545 = vmatpush1.xpose.msra.mxu0 0.0
  %546 = vmatprep.subr.mxu0 0.0
  %547 = vmatpush1.xpose.msra.mxu0 0.0
  %548 = vmatprep.subr.mxu0 0.0
  %549 = vmatpush1.xpose.msra.mxu0 0.0
  %550 = vmatprep.subr.mxu0 0.0
  %551 = vmatpush1.xpose.msra.mxu0 0.0
  %552 = vmatprep.subr.mxu0 0.0
  %553 = vmatpush1.xpose.msra.mxu0 0.0
  %554 = vmatprep.subr.mxu0 0.0
  %555 = vmatpush1.xpose.msra.mxu0 0.0
  %556 = vmatprep.subr.mxu0 0.0
  %557 = vmatpush1.xpose.msra.mxu0 0.0
  %558 = vmatprep.subr.mxu0 0.0
  %559 = vmatpush1.xpose.msra.mxu0 0.0
  %560 = vmatprep.subr.mxu0 0.0
  %561 = vmatpush1.xpose.msra.mxu0 0.0
  %562 = vmatprep.mubr.f32.mxu0 0.0
  %563 = vmatmul.mubr.f32.gmra.mrb[0].mxu0 %v495
  %v564 = vpop.f32.mrb[0].mxu0
  %v565 = vadd.f32 0.0, %v564
  %v566 = vpop.f32.mrb[0].mxu0
  %567 = vdwg.mxu0
  %v568 = vmul.f32 %v565, 0.015625
  %vm569 = vcmask 15360
  %v571 = vsel %vm569, %v568, 0
  %vm573 = vcmask 1041408
  %v575 = vsel %vm573, %v333, 0
  %577 = vmatprep.subr.mxu0 0.0
  %578 = vmatpush1.msra.mxu0 %v575
  %579 = vmatprep.subr.mxu0 0.0
  %580 = vmatpush1.msra.mxu0 0.0
  %581 = vmatprep.subr.mxu0 0.0
  %582 = vmatpush1.msra.mxu0 0.0
  %583 = vmatprep.subr.mxu0 0.0
  %584 = vmatpush1.msra.mxu0 0.0
  %585 = vmatprep.subr.mxu0 0.0
  %586 = vmatpush1.msra.mxu0 0.0
  %587 = vmatprep.subr.mxu0 0.0
  %588 = vmatpush1.msra.mxu0 0.0
  %589 = vmatprep.subr.mxu0 0.0
  %590 = vmatpush1.msra.mxu0 0.0
  %591 = vmatprep.subr.mxu0 0.0
  %592 = vmatpush1.msra.mxu0 0.0
  %593 = vmatprep.subr.mxu0 0.0
  %594 = vmatpush1.msra.mxu0 0.0
  %595 = vmatprep.subr.mxu0 0.0
  %596 = vmatpush1.msra.mxu0 0.0
  %597 = vmatprep.subr.mxu0 0.0
  %598 = vmatpush1.msra.mxu0 0.0
  %599 = vmatprep.subr.mxu0 0.0
  %600 = vmatpush1.msra.mxu0 0.0
  %601 = vmatprep.subr.mxu0 0.0
  %602 = vmatpush1.msra.mxu0 0.0
  %603 = vmatprep.subr.mxu0 0.0
  %604 = vmatpush1.msra.mxu0 0.0
  %605 = vmatprep.subr.mxu0 0.0
  %606 = vmatpush1.msra.mxu0 0.0
  %607 = vmatprep.subr.mxu0 0.0
  %608 = vmatpush1.msra.mxu0 0.0
  %609 = vmatprep.subr.mxu0 0.0
  %610 = vmatpush1.msra.mxu0 0.0
  %611 = vmatprep.subr.mxu0 0.0
  %612 = vmatpush1.msra.mxu0 0.0
  %613 = vmatprep.subr.mxu0 0.0
  %614 = vmatpush1.msra.mxu0 0.0
  %615 = vmatprep.subr.mxu0 0.0
  %616 = vmatpush1.msra.mxu0 0.0
  %617 = vmatprep.subr.mxu0 0.0
  %618 = vmatpush1.msra.mxu0 0.0
  %619 = vmatprep.subr.mxu0 0.0
  %620 = vmatpush1.msra.mxu0 0.0
  %621 = vmatprep.subr.mxu0 0.0
  %622 = vmatpush1.msra.mxu0 0.0
  %623 = vmatprep.subr.mxu0 0.0
  %624 = vmatpush1.msra.mxu0 0.0
  %625 = vmatprep.subr.mxu0 0.0
  %626 = vmatpush1.msra.mxu0 0.0
  %627 = vmatprep.subr.mxu0 0.0
  %628 = vmatpush1.msra.mxu0 0.0
  %629 = vmatprep.subr.mxu0 0.0
  %630 = vmatpush1.msra.mxu0 0.0
  %631 = vmatprep.subr.mxu0 0.0
  %632 = vmatpush1.msra.mxu0 0.0
  %633 = vmatprep.subr.mxu0 0.0
  %634 = vmatpush1.msra.mxu0 0.0
  %635 = vmatprep.subr.mxu0 0.0
  %636 = vmatpush1.msra.mxu0 0.0
  %637 = vmatprep.subr.mxu0 0.0
  %638 = vmatpush1.msra.mxu0 0.0
  %639 = vmatprep.subr.mxu0 0.0
  %640 = vmatpush1.msra.mxu0 0.0
  %641 = vmatprep.mubr.f32.mxu0 0.0
  %642 = vmatmul.mubr.f32.gmra.mrb[0].mxu0 %v571
  %v643 = vpop.f32.mrb[0].mxu0
  %v644 = vadd.f32 0.0, %v643
  %v645 = vpop.f32.mrb[0].mxu0
  %646 = vdwg.mxu0
  %v647 = vsub.f32 %v495, %v644
  %v648 = vmul.f32 %v647, %v647
  %649 = vmatprep.subr.mxu0 0.0
  %650 = vmatpush1.xpose.msra.mxu0 %v333
  %651 = vmatprep.subr.mxu0 0.0
  %652 = vmatpush1.xpose.msra.mxu0 0.0
  %653 = vmatprep.subr.mxu0 0.0
  %654 = vmatpush1.xpose.msra.mxu0 0.0
  %655 = vmatprep.subr.mxu0 0.0
  %656 = vmatpush1.xpose.msra.mxu0 0.0
  %657 = vmatprep.subr.mxu0 0.0
  %658 = vmatpush1.xpose.msra.mxu0 0.0
  %659 = vmatprep.subr.mxu0 0.0
  %660 = vmatpush1.xpose.msra.mxu0 0.0
  %661 = vmatprep.subr.mxu0 0.0
  %662 = vmatpush1.xpose.msra.mxu0 0.0
  %663 = vmatprep.subr.mxu0 0.0
  %664 = vmatpush1.xpose.msra.mxu0 0.0
  %665 = vmatprep.subr.mxu0 0.0
  %666 = vmatpush1.xpose.msra.mxu0 0.0
  %667 = vmatprep.subr.mxu0 0.0
  %668 = vmatpush1.xpose.msra.mxu0 0.0
  %669 = vmatprep.subr.mxu0 0.0
  %670 = vmatpush1.xpose.msra.mxu0 0.0
  %671 = vmatprep.subr.mxu0 0.0
  %672 = vmatpush1.xpose.msra.mxu0 0.0
  %673 = vmatprep.subr.mxu0 0.0
  %674 = vmatpush1.xpose.msra.mxu0 0.0
  %675 = vmatprep.subr.mxu0 0.0
  %676 = vmatpush1.xpose.msra.mxu0 0.0
  %677 = vmatprep.subr.mxu0 0.0
  %678 = vmatpush1.xpose.msra.mxu0 0.0
  %679 = vmatprep.subr.mxu0 0.0
  %680 = vmatpush1.xpose.msra.mxu0 0.0
  %681 = vmatprep.subr.mxu0 0.0
  %682 = vmatpush1.xpose.msra.mxu0 0.0
  %683 = vmatprep.subr.mxu0 0.0
  %684 = vmatpush1.xpose.msra.mxu0 0.0
  %685 = vmatprep.subr.mxu0 0.0
  %686 = vmatpush1.xpose.msra.mxu0 0.0
  %687 = vmatprep.subr.mxu0 0.0
  %688 = vmatpush1.xpose.msra.mxu0 0.0
  %689 = vmatprep.subr.mxu0 0.0
  %690 = vmatpush1.xpose.msra.mxu0 0.0
  %691 = vmatprep.subr.mxu0 0.0
  %692 = vmatpush1.xpose.msra.mxu0 0.0
  %693 = vmatprep.subr.mxu0 0.0
  %694 = vmatpush1.xpose.msra.mxu0 0.0
  %695 = vmatprep.subr.mxu0 0.0
  %696 = vmatpush1.xpose.msra.mxu0 0.0
  %697 = vmatprep.subr.mxu0 0.0
  %698 = vmatpush1.xpose.msra.mxu0 0.0
  %699 = vmatprep.subr.mxu0 0.0
  %700 = vmatpush1.xpose.msra.mxu0 0.0
  %701 = vmatprep.subr.mxu0 0.0
  %702 = vmatpush1.xpose.msra.mxu0 0.0
  %703 = vmatprep.subr.mxu0 0.0
  %704 = vmatpush1.xpose.msra.mxu0 0.0
  %705 = vmatprep.subr.mxu0 0.0
  %706 = vmatpush1.xpose.msra.mxu0 0.0
  %707 = vmatprep.subr.mxu0 0.0
  %708 = vmatpush1.xpose.msra.mxu0 0.0
  %709 = vmatprep.subr.mxu0 0.0
  %710 = vmatpush1.xpose.msra.mxu0 0.0
  %711 = vmatprep.subr.mxu0 0.0
  %712 = vmatpush1.xpose.msra.mxu0 0.0
  %713 = vmatprep.mubr.f32.mxu0 0.0
  %714 = vmatmul.mubr.f32.gmra.mrb[0].mxu0 %v648
  %v715 = vpop.f32.mrb[0].mxu0
  %v716 = vadd.f32 0.0, %v715
  %v717 = vpop.f32.mrb[0].mxu0
  %718 = vdwg.mxu0
  %v719 = vmul.f32 %v716, 0.015625
  %v721 = vsel %vm569, %v719, 0
  %723 = vmatprep.subr.mxu0 0.0
  %724 = vmatpush1.msra.mxu0 %v575
  %725 = vmatprep.subr.mxu0 0.0
  %726 = vmatpush1.msra.mxu0 0.0
  %727 = vmatprep.subr.mxu0 0.0
  %728 = vmatpush1.msra.mxu0 0.0
  %729 = vmatprep.subr.mxu0 0.0
  %730 = vmatpush1.msra.mxu0 0.0
  %731 = vmatprep.subr.mxu0 0.0
  %732 = vmatpush1.msra.mxu0 0.0
  %733 = vmatprep.subr.mxu0 0.0
  %734 = vmatpush1.msra.mxu0 0.0
  %735 = vmatprep.subr.mxu0 0.0
  %736 = vmatpush1.msra.mxu0 0.0
  %737 = vmatprep.subr.mxu0 0.0
  %738 = vmatpush1.msra.mxu0 0.0
  %739 = vmatprep.subr.mxu0 0.0
  %740 = vmatpush1.msra.mxu0 0.0
  %741 = vmatprep.subr.mxu0 0.0
  %742 = vmatpush1.msra.mxu0 0.0
  %743 = vmatprep.subr.mxu0 0.0
  %744 = vmatpush1.msra.mxu0 0.0
  %745 = vmatprep.subr.mxu0 0.0
  %746 = vmatpush1.msra.mxu0 0.0
  %747 = vmatprep.subr.mxu0 0.0
  %748 = vmatpush1.msra.mxu0 0.0
  %749 = vmatprep.subr.mxu0 0.0
  %750 = vmatpush1.msra.mxu0 0.0
  %751 = vmatprep.subr.mxu0 0.0
  %752 = vmatpush1.msra.mxu0 0.0
  %753 = vmatprep.subr.mxu0 0.0
  %754 = vmatpush1.msra.mxu0 0.0
  %755 = vmatprep.subr.mxu0 0.0
  %756 = vmatpush1.msra.mxu0 0.0
  %757 = vmatprep.subr.mxu0 0.0
  %758 = vmatpush1.msra.mxu0 0.0
  %759 = vmatprep.subr.mxu0 0.0
  %760 = vmatpush1.msra.mxu0 0.0
  %761 = vmatprep.subr.mxu0 0.0
  %762 = vmatpush1.msra.mxu0 0.0
  %763 = vmatprep.subr.mxu0 0.0
  %764 = vmatpush1.msra.mxu0 0.0
  %765 = vmatprep.subr.mxu0 0.0
  %766 = vmatpush1.msra.mxu0 0.0
  %767 = vmatprep.subr.mxu0 0.0
  %768 = vmatpush1.msra.mxu0 0.0
  %769 = vmatprep.subr.mxu0 0.0
  %770 = vmatpush1.msra.mxu0 0.0
  %771 = vmatprep.subr.mxu0 0.0
  %772 = vmatpush1.msra.mxu0 0.0
  %773 = vmatprep.subr.mxu0 0.0
  %774 = vmatpush1.msra.mxu0 0.0
  %775 = vmatprep.subr.mxu0 0.0
  %776 = vmatpush1.msra.mxu0 0.0
  %777 = vmatprep.subr.mxu0 0.0
  %778 = vmatpush1.msra.mxu0 0.0
  %779 = vmatprep.subr.mxu0 0.0
  %780 = vmatpush1.msra.mxu0 0.0
  %781 = vmatprep.subr.mxu0 0.0
  %782 = vmatpush1.msra.mxu0 0.0
  %783 = vmatprep.subr.mxu0 0.0
  %784 = vmatpush1.msra.mxu0 0.0
  %785 = vmatprep.subr.mxu0 0.0
  %786 = vmatpush1.msra.mxu0 0.0
  %787 = vmatprep.mubr.f32.mxu0 0.0
  %788 = vmatmul.mubr.f32.gmra.mrb[0].mxu0 %v721
  %v789 = vpop.f32.mrb[0].mxu0
  %v790 = vadd.f32 1e-05, %v789
  %v791 = vpop.f32.mrb[0].mxu0
  %792 = vdwg.mxu0
  %v793 = vrsqrt.pop %v790
  %v794 = vmul.f32 %v647, %v793
  %vm795 = vcmp.ge.f32.partialorder %v794, 0.0
  %v796 = vmul.f32 %v794, 0.01
  %v797 = vsel %vm795, %v794, %v796
  %798 = vrot.lane.b32.xlu0 %v797, 9
  %v799 = vpop.permute.xlu0 %798
  %v800 = vld [vmem:[%s5] sm:$0x1]
  %v801 = vlaneseq
  %v802 = vshrl.u32 %v801, 7
  %v803 = vsub.s32 0, %v802
  %v804 = vrot.slane %v800, %v803
  %v805 = vmul.f32 %v799, %v804
  %806 = vst [vmem:[#allocation3] sm:$0xff] %v805
  %807 = vrot.lane.b32.xlu0 %v797, 8
  %v808 = vpop.permute.xlu0 %807
  %v809 = vld [vmem:[%s5 + $0x1] sm:$0x1]
  %v810 = vlaneseq
  %v811 = vshrl.u32 %v810, 7
  %v812 = vsub.s32 0, %v811
  %v813 = vrot.slane %v809, %v812
  %v814 = vmul.f32 %v808, %v813
  %815 = vst [vmem:[#allocation3 + $0x8] sm:$0xff] %v814
  %816 = vrot.lane.b32.xlu0 %v797, 7
  %v817 = vpop.permute.xlu0 %816
  %v818 = vld [vmem:[%s5 + $0x2] sm:$0x1]
  %v819 = vlaneseq
  %v820 = vshrl.u32 %v819, 7
  %v821 = vsub.s32 0, %v820
  %v822 = vrot.slane %v818, %v821
  %v823 = vmul.f32 %v817, %v822
  %824 = vst [vmem:[#allocation3 + $0x10] sm:$0xff] %v823
  %825 = vrot.lane.b32.xlu0 %v797, 1
  %v826 = vpop.permute.xlu0 %825
  %v827 = vld [vmem:[%s5 + $0x3] sm:$0x1]
  %v828 = vlaneseq
  %v829 = vshrl.u32 %v828, 7
  %v830 = vsub.s32 0, %v829
  %v831 = vrot.slane %v827, %v830
  %v832 = vmul.f32 %v826, %v831
  %833 = vst [vmem:[#allocation3 + $0x18] sm:$0xff] %v832
  %v834 = vld [vmem:[%s5 + $0x4] sm:$0x1]
  %v835 = vlaneseq
  %v836 = vshrl.u32 %v835, 7
  %v837 = vsub.s32 0, %v836
  %v838 = vrot.slane %v834, %v837
  %v839 = vmul.f32 %v797, %v838
  %840 = vst [vmem:[#allocation3 + $0x20] sm:$0xff] %v839
  %841 = vrot.lane.b32.xlu0 %v797, 127
  %v842 = vpop.permute.xlu0 %841
  %v843 = vld [vmem:[%s5 + $0x5] sm:$0x1]
  %v844 = vlaneseq
  %v845 = vshrl.u32 %v844, 7
  %v846 = vsub.s32 0, %v845
  %v847 = vrot.slane %v843, %v846
  %v848 = vmul.f32 %v842, %v847
  %849 = vst [vmem:[#allocation3 + $0x28] sm:$0xff] %v848
  %850 = vrot.lane.b32.xlu0 %v797, 121
  %v851 = vpop.permute.xlu0 %850
  %v852 = vld [vmem:[%s5 + $0x6] sm:$0x1]
  %v853 = vlaneseq
  %v854 = vshrl.u32 %v853, 7
  %v855 = vsub.s32 0, %v854
  %v856 = vrot.slane %v852, %v855
  %v857 = vmul.f32 %v851, %v856
  %858 = vst [vmem:[#allocation3 + $0x30] sm:$0xff] %v857
  %859 = vrot.lane.b32.xlu0 %v797, 120
  %v860 = vpop.permute.xlu0 %859
  %v861 = vld [vmem:[%s5 + $0x7] sm:$0x1]
  %v862 = vlaneseq
  %v863 = vshrl.u32 %v862, 7
  %v864 = vsub.s32 0, %v863
  %v865 = vrot.slane %v861, %v864
  %v866 = vmul.f32 %v860, %v865
  %867 = vst [vmem:[#allocation3 + $0x38] sm:$0xff] %v866
  %868 = vrot.lane.b32.xlu0 %v797, 119
  %v869 = vpop.permute.xlu0 %868
  %v870 = vld [vmem:[%s5 + $0x8] sm:$0x1]
  %v871 = vlaneseq
  %v872 = vshrl.u32 %v871, 7
  %v873 = vsub.s32 0, %v872
  %v874 = vrot.slane %v870, %v873
  %v875 = vmul.f32 %v869, %v874
  %876 = vst [vmem:[#allocation3 + $0x40] sm:$0xff] %v875
  %v877 = vld [vmem:[%s2] sm:$0xff]
  %v878 = vld [vmem:[#allocation3] sm:$0xff]
  %v879 = vld [vmem:[#allocation3 + $0x8] sm:$0xff]
  %v880 = vld [vmem:[#allocation3 + $0x10] sm:$0xff]
  %v881 = vld [vmem:[#allocation3 + $0x18] sm:$0xff]
  %v882 = vld [vmem:[#allocation3 + $0x20] sm:$0xff]
  %v883 = vld [vmem:[#allocation3 + $0x28] sm:$0xff]
  %v884 = vld [vmem:[#allocation3 + $0x30] sm:$0xff]
  %v885 = vld [vmem:[#allocation3 + $0x38] sm:$0xff]
  %v886 = vld [vmem:[#allocation3 + $0x40] sm:$0xff]
  %v888 = vsel %vm424, %v877, 0
  %890 = vmatprep.subr.mxu0 0.0
  %891 = vmatpush1.msra.mxu0 %v878
  %892 = vmatprep.subr.mxu0 0.0
  %893 = vmatpush1.msra.mxu0 %v879
  %894 = vmatprep.subr.mxu0 0.0
  %895 = vmatpush1.msra.mxu0 %v880
  %896 = vmatprep.subr.mxu0 0.0
  %897 = vmatpush1.msra.mxu0 %v881
  %898 = vmatprep.subr.mxu0 0.0
  %899 = vmatpush1.msra.mxu0 %v882
  %900 = vmatprep.subr.mxu0 0.0
  %901 = vmatpush1.msra.mxu0 %v883
  %902 = vmatprep.subr.mxu0 0.0
  %903 = vmatpush1.msra.mxu0 %v884
  %904 = vmatprep.subr.mxu0 0.0
  %905 = vmatpush1.msra.mxu0 %v885
  %906 = vmatprep.subr.mxu0 0.0
  %907 = vmatpush1.msra.mxu0 %v886
  %908 = vmatprep.subr.mxu0 0.0
  %909 = vmatpush1.msra.mxu0 0.0
  %910 = vmatprep.subr.mxu0 0.0
  %911 = vmatpush1.msra.mxu0 0.0
  %912 = vmatprep.subr.mxu0 0.0
  %913 = vmatpush1.msra.mxu0 0.0
  %914 = vmatprep.subr.mxu0 0.0
  %915 = vmatpush1.msra.mxu0 0.0
  %916 = vmatprep.subr.mxu0 0.0
  %917 = vmatpush1.msra.mxu0 0.0
  %918 = vmatprep.subr.mxu0 0.0
  %919 = vmatpush1.msra.mxu0 0.0
  %920 = vmatprep.subr.mxu0 0.0
  %921 = vmatpush1.msra.mxu0 0.0
  %922 = vmatprep.subr.mxu0 0.0
  %923 = vmatpush1.msra.mxu0 0.0
  %924 = vmatprep.subr.mxu0 0.0
  %925 = vmatpush1.msra.mxu0 0.0
  %926 = vmatprep.subr.mxu0 0.0
  %927 = vmatpush1.msra.mxu0 0.0
  %928 = vmatprep.subr.mxu0 0.0
  %929 = vmatpush1.msra.mxu0 0.0
  %930 = vmatprep.subr.mxu0 0.0
  %931 = vmatpush1.msra.mxu0 0.0
  %932 = vmatprep.subr.mxu0 0.0
  %933 = vmatpush1.msra.mxu0 0.0
  %934 = vmatprep.subr.mxu0 0.0
  %935 = vmatpush1.msra.mxu0 0.0
  %936 = vmatprep.subr.mxu0 0.0
  %937 = vmatpush1.msra.mxu0 0.0
  %938 = vmatprep.subr.mxu0 0.0
  %939 = vmatpush1.msra.mxu0 0.0
  %940 = vmatprep.subr.mxu0 0.0
  %941 = vmatpush1.msra.mxu0 0.0
  %942 = vmatprep.subr.mxu0 0.0
  %943 = vmatpush1.msra.mxu0 0.0
  %944 = vmatprep.subr.mxu0 0.0
  %945 = vmatpush1.msra.mxu0 0.0
  %946 = vmatprep.subr.mxu0 0.0
  %947 = vmatpush1.msra.mxu0 0.0
  %948 = vmatprep.subr.mxu0 0.0
  %949 = vmatpush1.msra.mxu0 0.0
  %950 = vmatprep.subr.mxu0 0.0
  %951 = vmatpush1.msra.mxu0 0.0
  %952 = vmatprep.subr.mxu0 0.0
  %953 = vmatpush1.msra.mxu0 0.0
  %954 = vmatprep.mubr.f32.mxu0 0.0
  %955 = vmatmul.mubr.f32.gmra.mrb[0].mxu0 %v888
  %v956 = vpop.f32.mrb[0].mxu0
  %v957 = vadd.f32 0.0, %v956
  %v958 = vpop.f32.mrb[0].mxu0
  %959 = vdwg.mxu0
  %960 = vmatprep.subr.mxu0 0.0
  %961 = vmatpush1.xpose.msra.mxu0 %v333
  %962 = vmatprep.subr.mxu0 0.0
  %963 = vmatpush1.xpose.msra.mxu0 0.0
  %964 = vmatprep.subr.mxu0 0.0
  %965 = vmatpush1.xpose.msra.mxu0 0.0
  %966 = vmatprep.subr.mxu0 0.0
  %967 = vmatpush1.xpose.msra.mxu0 0.0
  %968 = vmatprep.subr.mxu0 0.0
  %969 = vmatpush1.xpose.msra.mxu0 0.0
  %970 = vmatprep.subr.mxu0 0.0
  %971 = vmatpush1.xpose.msra.mxu0 0.0
  %972 = vmatprep.subr.mxu0 0.0
  %973 = vmatpush1.xpose.msra.mxu0 0.0
  %974 = vmatprep.subr.mxu0 0.0
  %975 = vmatpush1.xpose.msra.mxu0 0.0
  %976 = vmatprep.subr.mxu0 0.0
  %977 = vmatpush1.xpose.msra.mxu0 0.0
  %978 = vmatprep.subr.mxu0 0.0
  %979 = vmatpush1.xpose.msra.mxu0 0.0
  %980 = vmatprep.subr.mxu0 0.0
  %981 = vmatpush1.xpose.msra.mxu0 0.0
  %982 = vmatprep.subr.mxu0 0.0
  %983 = vmatpush1.xpose.msra.mxu0 0.0
  %984 = vmatprep.subr.mxu0 0.0
  %985 = vmatpush1.xpose.msra.mxu0 0.0
  %986 = vmatprep.subr.mxu0 0.0
  %987 = vmatpush1.xpose.msra.mxu0 0.0
  %988 = vmatprep.subr.mxu0 0.0
  %989 = vmatpush1.xpose.msra.mxu0 0.0
  %990 = vmatprep.subr.mxu0 0.0
  %991 = vmatpush1.xpose.msra.mxu0 0.0
  %992 = vmatprep.subr.mxu0 0.0
  %993 = vmatpush1.xpose.msra.mxu0 0.0
  %994 = vmatprep.subr.mxu0 0.0
  %995 = vmatpush1.xpose.msra.mxu0 0.0
  %996 = vmatprep.subr.mxu0 0.0
  %997 = vmatpush1.xpose.msra.mxu0 0.0
  %998 = vmatprep.subr.mxu0 0.0
  %999 = vmatpush1.xpose.msra.mxu0 0.0
  %1000 = vmatprep.subr.mxu0 0.0
  %1001 = vmatpush1.xpose.msra.mxu0 0.0
  %1002 = vmatprep.subr.mxu0 0.0
  %1003 = vmatpush1.xpose.msra.mxu0 0.0
  %1004 = vmatprep.subr.mxu0 0.0
  %1005 = vmatpush1.xpose.msra.mxu0 0.0
  %1006 = vmatprep.subr.mxu0 0.0
  %1007 = vmatpush1.xpose.msra.mxu0 0.0
  %1008 = vmatprep.subr.mxu0 0.0
  %1009 = vmatpush1.xpose.msra.mxu0 0.0
  %1010 = vmatprep.subr.mxu0 0.0
  %1011 = vmatpush1.xpose.msra.mxu0 0.0
  %1012 = vmatprep.subr.mxu0 0.0
  %1013 = vmatpush1.xpose.msra.mxu0 0.0
  %1014 = vmatprep.subr.mxu0 0.0
  %1015 = vmatpush1.xpose.msra.mxu0 0.0
  %1016 = vmatprep.subr.mxu0 0.0
  %1017 = vmatpush1.xpose.msra.mxu0 0.0
  %1018 = vmatprep.subr.mxu0 0.0
  %1019 = vmatpush1.xpose.msra.mxu0 0.0
  %1020 = vmatprep.subr.mxu0 0.0
  %1021 = vmatpush1.xpose.msra.mxu0 0.0
  %1022 = vmatprep.subr.mxu0 0.0
  %1023 = vmatpush1.xpose.msra.mxu0 0.0
  %1024 = vmatprep.mubr.f32.mxu0 0.0
  %1025 = vmatmul.mubr.f32.gmra.mrb[0].mxu0 %v957
  %v1026 = vpop.f32.mrb[0].mxu0
  %v1027 = vadd.f32 0.0, %v1026
  %v1028 = vpop.f32.mrb[0].mxu0
  %1029 = vdwg.mxu0
  %v1030 = vmul.f32 %v1027, 0.015625
  %v1032 = vsel %vm569, %v1030, 0
  %1034 = vmatprep.subr.mxu0 0.0
  %1035 = vmatpush1.msra.mxu0 %v575
  %1036 = vmatprep.subr.mxu0 0.0
  %1037 = vmatpush1.msra.mxu0 0.0
  %1038 = vmatprep.subr.mxu0 0.0
  %1039 = vmatpush1.msra.mxu0 0.0
  %1040 = vmatprep.subr.mxu0 0.0
  %1041 = vmatpush1.msra.mxu0 0.0
  %1042 = vmatprep.subr.mxu0 0.0
  %1043 = vmatpush1.msra.mxu0 0.0
  %1044 = vmatprep.subr.mxu0 0.0
  %1045 = vmatpush1.msra.mxu0 0.0
  %1046 = vmatprep.subr.mxu0 0.0
  %1047 = vmatpush1.msra.mxu0 0.0
  %1048 = vmatprep.subr.mxu0 0.0
  %1049 = vmatpush1.msra.mxu0 0.0
  %1050 = vmatprep.subr.mxu0 0.0
  %1051 = vmatpush1.msra.mxu0 0.0
  %1052 = vmatprep.subr.mxu0 0.0
  %1053 = vmatpush1.msra.mxu0 0.0
  %1054 = vmatprep.subr.mxu0 0.0
  %1055 = vmatpush1.msra.mxu0 0.0
  %1056 = vmatprep.subr.mxu0 0.0
  %1057 = vmatpush1.msra.mxu0 0.0
  %1058 = vmatprep.subr.mxu0 0.0
  %1059 = vmatpush1.msra.mxu0 0.0
  %1060 = vmatprep.subr.mxu0 0.0
  %1061 = vmatpush1.msra.mxu0 0.0
  %1062 = vmatprep.subr.mxu0 0.0
  %1063 = vmatpush1.msra.mxu0 0.0
  %1064 = vmatprep.subr.mxu0 0.0
  %1065 = vmatpush1.msra.mxu0 0.0
  %1066 = vmatprep.subr.mxu0 0.0
  %1067 = vmatpush1.msra.mxu0 0.0
  %1068 = vmatprep.subr.mxu0 0.0
  %1069 = vmatpush1.msra.mxu0 0.0
  %1070 = vmatprep.subr.mxu0 0.0
  %1071 = vmatpush1.msra.mxu0 0.0
  %1072 = vmatprep.subr.mxu0 0.0
  %1073 = vmatpush1.msra.mxu0 0.0
  %1074 = vmatprep.subr.mxu0 0.0
  %1075 = vmatpush1.msra.mxu0 0.0
  %1076 = vmatprep.subr.mxu0 0.0
  %1077 = vmatpush1.msra.mxu0 0.0
  %1078 = vmatprep.subr.mxu0 0.0
  %1079 = vmatpush1.msra.mxu0 0.0
  %1080 = vmatprep.subr.mxu0 0.0
  %1081 = vmatpush1.msra.mxu0 0.0
  %1082 = vmatprep.subr.mxu0 0.0
  %1083 = vmatpush1.msra.mxu0 0.0
  %1084 = vmatprep.subr.mxu0 0.0
  %1085 = vmatpush1.msra.mxu0 0.0
  %1086 = vmatprep.subr.mxu0 0.0
  %1087 = vmatpush1.msra.mxu0 0.0
  %1088 = vmatprep.subr.mxu0 0.0
  %1089 = vmatpush1.msra.mxu0 0.0
  %1090 = vmatprep.subr.mxu0 0.0
  %1091 = vmatpush1.msra.mxu0 0.0
  %1092 = vmatprep.subr.mxu0 0.0
  %1093 = vmatpush1.msra.mxu0 0.0
  %1094 = vmatprep.subr.mxu0 0.0
  %1095 = vmatpush1.msra.mxu0 0.0
  %1096 = vmatprep.subr.mxu0 0.0
  %1097 = vmatpush1.msra.mxu0 0.0
  %1098 = vmatprep.mubr.f32.mxu0 0.0
  %1099 = vmatmul.mubr.f32.gmra.mrb[0].mxu0 %v1032
  %v1100 = vpop.f32.mrb[0].mxu0
  %v1101 = vadd.f32 0.0, %v1100
  %v1102 = vpop.f32.mrb[0].mxu0
  %1103 = vdwg.mxu0
  %v1104 = vsub.f32 %v957, %v1101
  %v1105 = vmul.f32 %v1104, %v1104
  %1106 = vmatprep.subr.mxu0 0.0
  %1107 = vmatpush1.xpose.msra.mxu0 %v333
  %1108 = vmatprep.subr.mxu0 0.0
  %1109 = vmatpush1.xpose.msra.mxu0 0.0
  %1110 = vmatprep.subr.mxu0 0.0
  %1111 = vmatpush1.xpose.msra.mxu0 0.0
  %1112 = vmatprep.subr.mxu0 0.0
  %1113 = vmatpush1.xpose.msra.mxu0 0.0
  %1114 = vmatprep.subr.mxu0 0.0
  %1115 = vmatpush1.xpose.msra.mxu0 0.0
  %1116 = vmatprep.subr.mxu0 0.0
  %1117 = vmatpush1.xpose.msra.mxu0 0.0
  %1118 = vmatprep.subr.mxu0 0.0
  %1119 = vmatpush1.xpose.msra.mxu0 0.0
  %1120 = vmatprep.subr.mxu0 0.0
  %1121 = vmatpush1.xpose.msra.mxu0 0.0
  %1122 = vmatprep.subr.mxu0 0.0
  %1123 = vmatpush1.xpose.msra.mxu0 0.0
  %1124 = vmatprep.subr.mxu0 0.0
  %1125 = vmatpush1.xpose.msra.mxu0 0.0
  %1126 = vmatprep.subr.mxu0 0.0
  %1127 = vmatpush1.xpose.msra.mxu0 0.0
  %1128 = vmatprep.subr.mxu0 0.0
  %1129 = vmatpush1.xpose.msra.mxu0 0.0
  %1130 = vmatprep.subr.mxu0 0.0
  %1131 = vmatpush1.xpose.msra.mxu0 0.0
  %1132 = vmatprep.subr.mxu0 0.0
  %1133 = vmatpush1.xpose.msra.mxu0 0.0
  %1134 = vmatprep.subr.mxu0 0.0
  %1135 = vmatpush1.xpose.msra.mxu0 0.0
  %1136 = vmatprep.subr.mxu0 0.0
  %1137 = vmatpush1.xpose.msra.mxu0 0.0
  %1138 = vmatprep.subr.mxu0 0.0
  %1139 = vmatpush1.xpose.msra.mxu0 0.0
  %1140 = vmatprep.subr.mxu0 0.0
  %1141 = vmatpush1.xpose.msra.mxu0 0.0
  %1142 = vmatprep.subr.mxu0 0.0
  %1143 = vmatpush1.xpose.msra.mxu0 0.0
  %1144 = vmatprep.subr.mxu0 0.0
  %1145 = vmatpush1.xpose.msra.mxu0 0.0
  %1146 = vmatprep.subr.mxu0 0.0
  %1147 = vmatpush1.xpose.msra.mxu0 0.0
  %1148 = vmatprep.subr.mxu0 0.0
  %1149 = vmatpush1.xpose.msra.mxu0 0.0
  %1150 = vmatprep.subr.mxu0 0.0
  %1151 = vmatpush1.xpose.msra.mxu0 0.0
  %1152 = vmatprep.subr.mxu0 0.0
  %1153 = vmatpush1.xpose.msra.mxu0 0.0
  %1154 = vmatprep.subr.mxu0 0.0
  %1155 = vmatpush1.xpose.msra.mxu0 0.0
  %1156 = vmatprep.subr.mxu0 0.0
  %1157 = vmatpush1.xpose.msra.mxu0 0.0
  %1158 = vmatprep.subr.mxu0 0.0
  %1159 = vmatpush1.xpose.msra.mxu0 0.0
  %1160 = vmatprep.subr.mxu0 0.0
  %1161 = vmatpush1.xpose.msra.mxu0 0.0
  %1162 = vmatprep.subr.mxu0 0.0
  %1163 = vmatpush1.xpose.msra.mxu0 0.0
  %1164 = vmatprep.subr.mxu0 0.0
  %1165 = vmatpush1.xpose.msra.mxu0 0.0
  %1166 = vmatprep.subr.mxu0 0.0
  %1167 = vmatpush1.xpose.msra.mxu0 0.0
  %1168 = vmatprep.subr.mxu0 0.0
  %1169 = vmatpush1.xpose.msra.mxu0 0.0
  %1170 = vmatprep.mubr.f32.mxu0 0.0
  %1171 = vmatmul.mubr.f32.gmra.mrb[0].mxu0 %v1105
  %v1172 = vpop.f32.mrb[0].mxu0
  %v1173 = vadd.f32 0.0, %v1172
  %v1174 = vpop.f32.mrb[0].mxu0
  %1175 = vdwg.mxu0
  %v1176 = vmul.f32 %v1173, 0.015625
  %v1178 = vsel %vm569, %v1176, 0
  %1180 = vmatprep.subr.mxu0 0.0
  %1181 = vmatpush1.msra.mxu0 %v575
  %1182 = vmatprep.subr.mxu0 0.0
  %1183 = vmatpush1.msra.mxu0 0.0
  %1184 = vmatprep.subr.mxu0 0.0
  %1185 = vmatpush1.msra.mxu0 0.0
  %1186 = vmatprep.subr.mxu0 0.0
  %1187 = vmatpush1.msra.mxu0 0.0
  %1188 = vmatprep.subr.mxu0 0.0
  %1189 = vmatpush1.msra.mxu0 0.0
  %1190 = vmatprep.subr.mxu0 0.0
  %1191 = vmatpush1.msra.mxu0 0.0
  %1192 = vmatprep.subr.mxu0 0.0
  %1193 = vmatpush1.msra.mxu0 0.0
  %1194 = vmatprep.subr.mxu0 0.0
  %1195 = vmatpush1.msra.mxu0 0.0
  %1196 = vmatprep.subr.mxu0 0.0
  %1197 = vmatpush1.msra.mxu0 0.0
  %1198 = vmatprep.subr.mxu0 0.0
  %1199 = vmatpush1.msra.mxu0 0.0
  %1200 = vmatprep.subr.mxu0 0.0
  %1201 = vmatpush1.msra.mxu0 0.0
  %1202 = vmatprep.subr.mxu0 0.0
  %1203 = vmatpush1.msra.mxu0 0.0
  %1204 = vmatprep.subr.mxu0 0.0
  %1205 = vmatpush1.msra.mxu0 0.0
  %1206 = vmatprep.subr.mxu0 0.0
  %1207 = vmatpush1.msra.mxu0 0.0
  %1208 = vmatprep.subr.mxu0 0.0
  %1209 = vmatpush1.msra.mxu0 0.0
  %1210 = vmatprep.subr.mxu0 0.0
  %1211 = vmatpush1.msra.mxu0 0.0
  %1212 = vmatprep.subr.mxu0 0.0
  %1213 = vmatpush1.msra.mxu0 0.0
  %1214 = vmatprep.subr.mxu0 0.0
  %1215 = vmatpush1.msra.mxu0 0.0
  %1216 = vmatprep.subr.mxu0 0.0
  %1217 = vmatpush1.msra.mxu0 0.0
  %1218 = vmatprep.subr.mxu0 0.0
  %1219 = vmatpush1.msra.mxu0 0.0
  %1220 = vmatprep.subr.mxu0 0.0
  %1221 = vmatpush1.msra.mxu0 0.0
  %1222 = vmatprep.subr.mxu0 0.0
  %1223 = vmatpush1.msra.mxu0 0.0
  %1224 = vmatprep.subr.mxu0 0.0
  %1225 = vmatpush1.msra.mxu0 0.0
  %1226 = vmatprep.subr.mxu0 0.0
  %1227 = vmatpush1.msra.mxu0 0.0
  %1228 = vmatprep.subr.mxu0 0.0
  %1229 = vmatpush1.msra.mxu0 0.0
  %1230 = vmatprep.subr.mxu0 0.0
  %1231 = vmatpush1.msra.mxu0 0.0
  %1232 = vmatprep.subr.mxu0 0.0
  %1233 = vmatpush1.msra.mxu0 0.0
  %1234 = vmatprep.subr.mxu0 0.0
  %1235 = vmatpush1.msra.mxu0 0.0
  %1236 = vmatprep.subr.mxu0 0.0
  %1237 = vmatpush1.msra.mxu0 0.0
  %1238 = vmatprep.subr.mxu0 0.0
  %1239 = vmatpush1.msra.mxu0 0.0
  %1240 = vmatprep.subr.mxu0 0.0
  %1241 = vmatpush1.msra.mxu0 0.0
  %1242 = vmatprep.subr.mxu0 0.0
  %1243 = vmatpush1.msra.mxu0 0.0
  %1244 = vmatprep.mubr.f32.mxu0 0.0
  %1245 = vmatmul.mubr.f32.gmra.mrb[0].mxu0 %v1178
  %v1246 = vpop.f32.mrb[0].mxu0
  %v1247 = vadd.f32 1e-05, %v1246
  %v1248 = vpop.f32.mrb[0].mxu0
  %1249 = vdwg.mxu0
  %v1250 = vrsqrt.pop %v1247
  %v1251 = vmul.f32 %v1104, %v1250
  %vm1252 = vcmp.ge.f32.partialorder %v1251, 0.0
  %v1253 = vmul.f32 %v1251, 0.01
  %v1254 = vsel %vm1252, %v1251, %v1253
  %v1255 = vld [vmem:[%s3] sm:$0xff]
  %v1256 = vld [vmem:[%s3 + $0x8] sm:$0xff]
  %vm1257 = vcmask 64512
  %v1259 = vsel %vm1257, %v1255, 0
  %v1262 = vsel %vm1257, %v1256, 0
  %1264 = vmatprep.subr.mxu0 0.0
  %1265 = vmatpush1.msra.mxu0 %v1254
  %1266 = vmatprep.subr.mxu0 0.0
  %1267 = vmatpush1.msra.mxu0 0.0
  %1268 = vmatprep.subr.mxu0 0.0
  %1269 = vmatpush1.msra.mxu0 0.0
  %1270 = vmatprep.subr.mxu0 0.0
  %1271 = vmatpush1.msra.mxu0 0.0
  %1272 = vmatprep.subr.mxu0 0.0
  %1273 = vmatpush1.msra.mxu0 0.0
  %1274 = vmatprep.subr.mxu0 0.0
  %1275 = vmatpush1.msra.mxu0 0.0
  %1276 = vmatprep.subr.mxu0 0.0
  %1277 = vmatpush1.msra.mxu0 0.0
  %1278 = vmatprep.subr.mxu0 0.0
  %1279 = vmatpush1.msra.mxu0 0.0
  %1280 = vmatprep.subr.mxu0 0.0
  %1281 = vmatpush1.msra.mxu0 0.0
  %1282 = vmatprep.subr.mxu0 0.0
  %1283 = vmatpush1.msra.mxu0 0.0
  %1284 = vmatprep.subr.mxu0 0.0
  %1285 = vmatpush1.msra.mxu0 0.0
  %1286 = vmatprep.subr.mxu0 0.0
  %1287 = vmatpush1.msra.mxu0 0.0
  %1288 = vmatprep.subr.mxu0 0.0
  %1289 = vmatpush1.msra.mxu0 0.0
  %1290 = vmatprep.subr.mxu0 0.0
  %1291 = vmatpush1.msra.mxu0 0.0
  %1292 = vmatprep.subr.mxu0 0.0
  %1293 = vmatpush1.msra.mxu0 0.0
  %1294 = vmatprep.subr.mxu0 0.0
  %1295 = vmatpush1.msra.mxu0 0.0
  %1296 = vmatprep.subr.mxu0 0.0
  %1297 = vmatpush1.msra.mxu0 0.0
  %1298 = vmatprep.subr.mxu0 0.0
  %1299 = vmatpush1.msra.mxu0 0.0
  %1300 = vmatprep.subr.mxu0 0.0
  %1301 = vmatpush1.msra.mxu0 0.0
  %1302 = vmatprep.subr.mxu0 0.0
  %1303 = vmatpush1.msra.mxu0 0.0
  %1304 = vmatprep.subr.mxu0 0.0
  %1305 = vmatpush1.msra.mxu0 0.0
  %1306 = vmatprep.subr.mxu0 0.0
  %1307 = vmatpush1.msra.mxu0 0.0
  %1308 = vmatprep.subr.mxu0 0.0
  %1309 = vmatpush1.msra.mxu0 0.0
  %1310 = vmatprep.subr.mxu0 0.0
  %1311 = vmatpush1.msra.mxu0 0.0
  %1312 = vmatprep.subr.mxu0 0.0
  %1313 = vmatpush1.msra.mxu0 0.0
  %1314 = vmatprep.subr.mxu0 0.0
  %1315 = vmatpush1.msra.mxu0 0.0
  %1316 = vmatprep.subr.mxu0 0.0
  %1317 = vmatpush1.msra.mxu0 0.0
  %1318 = vmatprep.subr.mxu0 0.0
  %1319 = vmatpush1.msra.mxu0 0.0
  %1320 = vmatprep.subr.mxu0 0.0
  %1321 = vmatpush1.msra.mxu0 0.0
  %1322 = vmatprep.subr.mxu0 0.0
  %1323 = vmatpush1.msra.mxu0 0.0
  %1324 = vmatprep.subr.mxu0 0.0
  %1325 = vmatpush1.msra.mxu0 0.0
  %1326 = vmatprep.subr.mxu0 0.0
  %1327 = vmatpush1.msra.mxu0 0.0
  %1328 = vmatprep.mubr.f32.mxu0 0.0
  %1329 = vmatmul.mubr.f32.gmra.mrb[0].mxu0 %v1259
  %v1330 = vpop.f32.mrb[0].mxu0
  %v1331 = vadd.f32 0.0, %v1330
  %v1332 = vpop.f32.mrb[0].mxu0
  %1333 = vmatprep.mubr.f32.mxu0 0.0
  %1334 = vmatmul.mubr.f32.gmra.mrb[0].mxu0 %v1262
  %v1335 = vpop.f32.mrb[0].mxu0
  %v1336 = vadd.f32 0.0, %v1335
  %v1337 = vpop.f32.mrb[0].mxu0
  %1338 = vdwg.mxu0
  %v1339 = vld [vmem:[%s7] sm:$0xff]
  %v1340 = vld [vmem:[%s7 + $0x8] sm:$0xff]
  %v1341 = vld [vmem:[%s7 + $0x10] sm:$0xff]
  %v1342 = vld [vmem:[%s7 + $0x18] sm:$0xff]
  %v1343 = vld [vmem:[%s7 + $0x20] sm:$0xff]
  %v1344 = vld [vmem:[%s7 + $0x28] sm:$0xff]
  %v1345 = vld [vmem:[%s7 + $0x30] sm:$0xff]
  %v1346 = vld [vmem:[%s7 + $0x38] sm:$0xff]
  %v1347 = vld [vmem:[%s7 + $0x40] sm:$0xff]
  %v1348 = vld [vmem:[%s7 + $0x48] sm:$0xff]
  %v1349 = vld [vmem:[%s7 + $0x50] sm:$0xff]
  %v1350 = vld [vmem:[%s7 + $0x58] sm:$0xff]
  %v1351 = vld [vmem:[%s7 + $0x60] sm:$0xff]
  %v1352 = vld [vmem:[%s7 + $0x68] sm:$0xff]
  %v1353 = vld [vmem:[%s7 + $0x70] sm:$0xff]
  %v1354 = vld [vmem:[%s7 + $0x78] sm:$0xff]
  %vm1355 = vcmask 523264
  %v1357 = vsel %vm1355, %v1331, 0
  %v1360 = vsel %vm1355, %v1336, 0
  %1362 = vmatprep.subr.mxu0 %v1340
  %1363 = vmatpush1.msra.mxu0 %v1339
  %1364 = vmatprep.subr.mxu0 %v1342
  %1365 = vmatpush1.msra.mxu0 %v1341
  %1366 = vmatprep.subr.mxu0 %v1344
  %1367 = vmatpush1.msra.mxu0 %v1343
  %1368 = vmatprep.subr.mxu0 %v1346
  %1369 = vmatpush1.msra.mxu0 %v1345
  %1370 = vmatprep.subr.mxu0 %v1348
  %1371 = vmatpush1.msra.mxu0 %v1347
  %1372 = vmatprep.subr.mxu0 %v1350
  %1373 = vmatpush1.msra.mxu0 %v1349
  %1374 = vmatprep.subr.mxu0 %v1352
  %1375 = vmatpush1.msra.mxu0 %v1351
  %1376 = vmatprep.subr.mxu0 %v1354
  %1377 = vmatpush1.msra.mxu0 %v1353
  %1378 = vmatprep.subr.mxu0 0.0
  %1379 = vmatpush1.msra.mxu0 0.0
  %1380 = vmatprep.subr.mxu0 0.0
  %1381 = vmatpush1.msra.mxu0 0.0
  %1382 = vmatprep.subr.mxu0 0.0
  %1383 = vmatpush1.msra.mxu0 0.0
  %1384 = vmatprep.subr.mxu0 0.0
  %1385 = vmatpush1.msra.mxu0 0.0
  %1386 = vmatprep.subr.mxu0 0.0
  %1387 = vmatpush1.msra.mxu0 0.0
  %1388 = vmatprep.subr.mxu0 0.0
  %1389 = vmatpush1.msra.mxu0 0.0
  %1390 = vmatprep.subr.mxu0 0.0
  %1391 = vmatpush1.msra.mxu0 0.0
  %1392 = vmatprep.subr.mxu0 0.0
  %1393 = vmatpush1.msra.mxu0 0.0
  %1394 = vmatprep.subr.mxu0 0.0
  %1395 = vmatpush1.msra.mxu0 0.0
  %1396 = vmatprep.subr.mxu0 0.0
  %1397 = vmatpush1.msra.mxu0 0.0
  %1398 = vmatprep.subr.mxu0 0.0
  %1399 = vmatpush1.msra.mxu0 0.0
  %1400 = vmatprep.subr.mxu0 0.0
  %1401 = vmatpush1.msra.mxu0 0.0
  %1402 = vmatprep.subr.mxu0 0.0
  %1403 = vmatpush1.msra.mxu0 0.0
  %1404 = vmatprep.subr.mxu0 0.0
  %1405 = vmatpush1.msra.mxu0 0.0
  %1406 = vmatprep.subr.mxu0 0.0
  %1407 = vmatpush1.msra.mxu0 0.0
  %1408 = vmatprep.subr.mxu0 0.0
  %1409 = vmatpush1.msra.mxu0 0.0
  %1410 = vmatprep.subr.mxu0 0.0
  %1411 = vmatpush1.msra.mxu0 0.0
  %1412 = vmatprep.subr.mxu0 0.0
  %1413 = vmatpush1.msra.mxu0 0.0
  %1414 = vmatprep.subr.mxu0 0.0
  %1415 = vmatpush1.msra.mxu0 0.0
  %1416 = vmatprep.subr.mxu0 0.0
  %1417 = vmatpush1.msra.mxu0 0.0
  %1418 = vmatprep.subr.mxu0 0.0
  %1419 = vmatpush1.msra.mxu0 0.0
  %1420 = vmatprep.subr.mxu0 0.0
  %1421 = vmatpush1.msra.mxu0 0.0
  %1422 = vmatprep.subr.mxu0 0.0
  %1423 = vmatpush1.msra.mxu0 0.0
  %1424 = vmatprep.subr.mxu0 0.0
  %1425 = vmatpush1.msra.mxu0 0.0
  %1426 = vmatprep.mubr.f32.mxu0 0.0
  %1427 = vmatmul.mubr.f32.gmra.mrb[0].mxu0 %v1357
  %v1428 = vpop.f32.mrb[0].mxu0
  %v1429 = vadd.f32 0.0, %v1428
  %v1430 = vpop.f32.mrb[0].mxu0
  %v1431 = vadd.f32 0.0, %v1430
  %1432 = vmatprep.mubr.f32.mxu0 0.0
  %1433 = vmatmul.mubr.f32.gmra.mrb[0].mxu0 %v1360
  %v1434 = vpop.f32.mrb[0].mxu0
  %v1435 = vadd.f32 0.0, %v1434
  %v1436 = vpop.f32.mrb[0].mxu0
  %v1437 = vadd.f32 0.0, %v1436
  %1438 = vdwg.mxu0
  %v1439 = vld [vmem:[%s8] ss:$4 sm:$0x3]
  %v1441 = vlaneseq
  %v1442 = vshrl.u32 %v1441, 7
  %v1443 = vsub.s32 0, %v1442
  %v1444 = vrot.slane %v1439, %v1443
  %v1445 = vlaneseq
  %v1446 = vshrl.u32 %v1445, 7
  %v1447 = vsub.s32 1, %v1446
  %v1448 = vrot.slane %v1439, %v1447
  %v1451 = vmul.f32 %v1429, %v1444
  %v1452 = vmul.f32 %v1431, %v1448
  %s1453 = scalar_lea.vmem %s8, 1
  %v1454 = vld [vmem:[%s1453] ss:$4 sm:$0x3]
  %v1456 = vlaneseq
  %v1457 = vshrl.u32 %v1456, 7
  %v1458 = vsub.s32 0, %v1457
  %v1459 = vrot.slane %v1454, %v1458
  %v1460 = vlaneseq
  %v1461 = vshrl.u32 %v1460, 7
  %v1462 = vsub.s32 1, %v1461
  %v1463 = vrot.slane %v1454, %v1462
  %v1466 = vmul.f32 %v1429, %v1459
  %v1467 = vmul.f32 %v1431, %v1463
  %v1470 = vrot.slane %v1466, 4
  %v1471 = vrot.slane %v1467, 4
  %v1474 = vadd.f32 %v1451, %v1470
  %v1475 = vadd.f32 %v1452, %v1471
  %s1476 = scalar_lea.vmem %s8, 2
  %v1477 = vld [vmem:[%s1476] ss:$4 sm:$0x3]
  %v1479 = vlaneseq
  %v1480 = vshrl.u32 %v1479, 7
  %v1481 = vsub.s32 0, %v1480
  %v1482 = vrot.slane %v1477, %v1481
  %v1483 = vlaneseq
  %v1484 = vshrl.u32 %v1483, 7
  %v1485 = vsub.s32 1, %v1484
  %v1486 = vrot.slane %v1477, %v1485
  %v1489 = vmul.f32 %v1435, %v1482
  %v1490 = vmul.f32 %v1437, %v1486
  %v1491 = vadd.f32 %v1474, %v1489
  %v1492 = vadd.f32 %v1475, %v1490
  %s1493 = scalar_lea.vmem %s8, 3
  %v1494 = vld [vmem:[%s1493] ss:$4 sm:$0x3]
  %v1496 = vlaneseq
  %v1497 = vshrl.u32 %v1496, 7
  %v1498 = vsub.s32 0, %v1497
  %v1499 = vrot.slane %v1494, %v1498
  %v1500 = vlaneseq
  %v1501 = vshrl.u32 %v1500, 7
  %v1502 = vsub.s32 1, %v1501
  %v1503 = vrot.slane %v1494, %v1502
  %v1506 = vmul.f32 %v1435, %v1499
  %v1507 = vmul.f32 %v1437, %v1503
  %v1510 = vrot.slane %v1506, 4
  %v1511 = vrot.slane %v1507, 4
  %v1514 = vadd.f32 %v1491, %v1510
  %v1515 = vadd.f32 %v1492, %v1511
  %v1516 = vld [vmem:[%s4] sm:$0xf]
  %1518 = vset.pattern.permute.xlu0 0
  %1519 = vperm.xlu0 %1518, %v1516
  %v1520 = vpop.permute.xlu0 %1519
  %v1522 = vadd.f32 %v1514, %v1520
  %v1523 = vadd.f32 %v1515, %v1520
  %v1526 = vrot.slane %v1522, 4
  %v1527 = vrot.slane %v1523, 4
  %1530 = vst [vmem:[%s10] sm:$0xf0] %v1526
  %1531 = vst [vmem:[%s10 + $0x8] sm:$0xf0] %v1527
  %v1532 = vld [vmem:[%s7] sm:$0xff]
  %v1533 = vld [vmem:[%s7 + $0x8] sm:$0xff]
  %v1534 = vld [vmem:[%s7 + $0x10] sm:$0xff]
  %v1535 = vld [vmem:[%s7 + $0x18] sm:$0xff]
  %v1536 = vld [vmem:[%s7 + $0x20] sm:$0xff]
  %v1537 = vld [vmem:[%s7 + $0x28] sm:$0xff]
  %v1538 = vld [vmem:[%s7 + $0x30] sm:$0xff]
  %v1539 = vld [vmem:[%s7 + $0x38] sm:$0xff]
  %v1540 = vld [vmem:[%s7 + $0x40] sm:$0xff]
  %v1541 = vld [vmem:[%s7 + $0x48] sm:$0xff]
  %v1542 = vld [vmem:[%s7 + $0x50] sm:$0xff]
  %v1543 = vld [vmem:[%s7 + $0x58] sm:$0xff]
  %v1544 = vld [vmem:[%s7 + $0x60] sm:$0xff]
  %v1545 = vld [vmem:[%s7 + $0x68] sm:$0xff]
  %v1546 = vld [vmem:[%s7 + $0x70] sm:$0xff]
  %v1547 = vld [vmem:[%s7 + $0x78] sm:$0xff]
  %1548 = vrot.lane.b32.xlu0 %v1331, 64
  %v1549 = vpop.permute.xlu0 %1548
  %1550 = vrot.lane.b32.xlu0 %v1336, 64
  %v1551 = vpop.permute.xlu0 %1550
  %v1552 = vsel %vm1355, %v1549, 0
  %v1554 = vsel %vm1355, %v1551, 0
  %1556 = vmatprep.subr.mxu0 %v1533
  %1557 = vmatpush1.msra.mxu0 %v1532
  %1558 = vmatprep.subr.mxu0 %v1535
  %1559 = vmatpush1.msra.mxu0 %v1534
  %1560 = vmatprep.subr.mxu0 %v1537
  %1561 = vmatpush1.msra.mxu0 %v1536
  %1562 = vmatprep.subr.mxu0 %v1539
  %1563 = vmatpush1.msra.mxu0 %v1538
  %1564 = vmatprep.subr.mxu0 %v1541
  %1565 = vmatpush1.msra.mxu0 %v1540
  %1566 = vmatprep.subr.mxu0 %v1543
  %1567 = vmatpush1.msra.mxu0 %v1542
  %1568 = vmatprep.subr.mxu0 %v1545
  %1569 = vmatpush1.msra.mxu0 %v1544
  %1570 = vmatprep.subr.mxu0 %v1547
  %1571 = vmatpush1.msra.mxu0 %v1546
  %1572 = vmatprep.subr.mxu0 0.0
  %1573 = vmatpush1.msra.mxu0 0.0
  %1574 = vmatprep.subr.mxu0 0.0
  %1575 = vmatpush1.msra.mxu0 0.0
  %1576 = vmatprep.subr.mxu0 0.0
  %1577 = vmatpush1.msra.mxu0 0.0
  %1578 = vmatprep.subr.mxu0 0.0
  %1579 = vmatpush1.msra.mxu0 0.0
  %1580 = vmatprep.subr.mxu0 0.0
  %1581 = vmatpush1.msra.mxu0 0.0
  %1582 = vmatprep.subr.mxu0 0.0
  %1583 = vmatpush1.msra.mxu0 0.0
  %1584 = vmatprep.subr.mxu0 0.0
  %1585 = vmatpush1.msra.mxu0 0.0
  %1586 = vmatprep.subr.mxu0 0.0
  %1587 = vmatpush1.msra.mxu0 0.0
  %1588 = vmatprep.subr.mxu0 0.0
  %1589 = vmatpush1.msra.mxu0 0.0
  %1590 = vmatprep.subr.mxu0 0.0
  %1591 = vmatpush1.msra.mxu0 0.0
  %1592 = vmatprep.subr.mxu0 0.0
  %1593 = vmatpush1.msra.mxu0 0.0
  %1594 = vmatprep.subr.mxu0 0.0
  %1595 = vmatpush1.msra.mxu0 0.0
  %1596 = vmatprep.subr.mxu0 0.0
  %1597 = vmatpush1.msra.mxu0 0.0
  %1598 = vmatprep.subr.mxu0 0.0
  %1599 = vmatpush1.msra.mxu0 0.0
  %1600 = vmatprep.subr.mxu0 0.0
  %1601 = vmatpush1.msra.mxu0 0.0
  %1602 = vmatprep.subr.mxu0 0.0
  %1603 = vmatpush1.msra.mxu0 0.0
  %1604 = vmatprep.subr.mxu0 0.0
  %1605 = vmatpush1.msra.mxu0 0.0
  %1606 = vmatprep.subr.mxu0 0.0
  %1607 = vmatpush1.msra.mxu0 0.0
  %1608 = vmatprep.subr.mxu0 0.0
  %1609 = vmatpush1.msra.mxu0 0.0
  %1610 = vmatprep.subr.mxu0 0.0
  %1611 = vmatpush1.msra.mxu0 0.0
  %1612 = vmatprep.subr.mxu0 0.0
  %1613 = vmatpush1.msra.mxu0 0.0
  %1614 = vmatprep.subr.mxu0 0.0
  %1615 = vmatpush1.msra.mxu0 0.0
  %1616 = vmatprep.subr.mxu0 0.0
  %1617 = vmatpush1.msra.mxu0 0.0
  %1618 = vmatprep.subr.mxu0 0.0
  %1619 = vmatpush1.msra.mxu0 0.0
  %1620 = vmatprep.mubr.f32.mxu0 0.0
  %1621 = vmatmul.mubr.f32.gmra.mrb[0].mxu0 %v1552
  %v1622 = vpop.f32.mrb[0].mxu0
  %v1623 = vadd.f32 0.0, %v1622
  %v1624 = vpop.f32.mrb[0].mxu0
  %v1625 = vadd.f32 0.0, %v1624
  %1626 = vmatprep.mubr.f32.mxu0 0.0
  %1627 = vmatmul.mubr.f32.gmra.mrb[0].mxu0 %v1554
  %v1628 = vpop.f32.mrb[0].mxu0
  %v1629 = vadd.f32 0.0, %v1628
  %v1630 = vpop.f32.mrb[0].mxu0
  %v1631 = vadd.f32 0.0, %v1630
  %1632 = vdwg.mxu0
  %v1633 = vld [vmem:[%s8] ss:$4 sm:$0x3]
  %v1635 = vlaneseq
  %v1636 = vshrl.u32 %v1635, 7
  %v1637 = vsub.s32 0, %v1636
  %v1638 = vrot.slane %v1633, %v1637
  %v1639 = vlaneseq
  %v1640 = vshrl.u32 %v1639, 7
  %v1641 = vsub.s32 1, %v1640
  %v1642 = vrot.slane %v1633, %v1641
  %v1645 = vmul.f32 %v1623, %v1638
  %v1646 = vmul.f32 %v1625, %v1642
  %v1647 = vld [vmem:[%s1453] ss:$4 sm:$0x3]
  %v1649 = vlaneseq
  %v1650 = vshrl.u32 %v1649, 7
  %v1651 = vsub.s32 0, %v1650
  %v1652 = vrot.slane %v1647, %v1651
  %v1653 = vlaneseq
  %v1654 = vshrl.u32 %v1653, 7
  %v1655 = vsub.s32 1, %v1654
  %v1656 = vrot.slane %v1647, %v1655
  %v1659 = vmul.f32 %v1623, %v1652
  %v1660 = vmul.f32 %v1625, %v1656
  %v1663 = vrot.slane %v1659, 4
  %v1664 = vrot.slane %v1660, 4
  %v1667 = vadd.f32 %v1645, %v1663
  %v1668 = vadd.f32 %v1646, %v1664
  %v1669 = vld [vmem:[%s1476] ss:$4 sm:$0x3]
  %v1671 = vlaneseq
  %v1672 = vshrl.u32 %v1671, 7
  %v1673 = vsub.s32 0, %v1672
  %v1674 = vrot.slane %v1669, %v1673
  %v1675 = vlaneseq
  %v1676 = vshrl.u32 %v1675, 7
  %v1677 = vsub.s32 1, %v1676
  %v1678 = vrot.slane %v1669, %v1677
  %v1681 = vmul.f32 %v1629, %v1674
  %v1682 = vmul.f32 %v1631, %v1678
  %v1683 = vadd.f32 %v1667, %v1681
  %v1684 = vadd.f32 %v1668, %v1682
  %v1685 = vld [vmem:[%s1493] ss:$4 sm:$0x3]
  %v1687 = vlaneseq
  %v1688 = vshrl.u32 %v1687, 7
  %v1689 = vsub.s32 0, %v1688
  %v1690 = vrot.slane %v1685, %v1689
  %v1691 = vlaneseq
  %v1692 = vshrl.u32 %v1691, 7
  %v1693 = vsub.s32 1, %v1692
  %v1694 = vrot.slane %v1685, %v1693
  %v1697 = vmul.f32 %v1629, %v1690
  %v1698 = vmul.f32 %v1631, %v1694
  %v1701 = vrot.slane %v1697, 4
  %v1702 = vrot.slane %v1698, 4
  %v1705 = vadd.f32 %v1683, %v1701
  %v1706 = vadd.f32 %v1684, %v1702
  %v1707 = vld [vmem:[%s4] sm:$0xf]
  %1709 = vset.pattern.permute.xlu0 0
  %1710 = vperm.xlu0 %1709, %v1707
  %v1711 = vpop.permute.xlu0 %1710
  %v1713 = vadd.f32 %v1705, %v1711
  %v1714 = vadd.f32 %v1706, %v1711
  %v1717 = vrot.slane %v1713, 4
  %v1718 = vrot.slane %v1714, 4
  %1721 = vst [vmem:[%s189] sm:$0xf0] %v1717
  %1722 = vst [vmem:[%s189 + $0x8] sm:$0xf0] %v1718
  // Predicated region
  $region42: #{unet_innermost_forward.1} parent=0 // pred_check
    _
  $region43: #{unet_innermost_forward.1} parent=0 // pred_check_branch
    %1724 = sbr.rel (0) target = $region45
  $region44: #{unet_innermost_forward.1} parent=0 // pred_region
    _
  $region45: #{unet_innermost_forward.1} parent=0 // pred_fallthru
    _
  // Predicated region
  $region46: #{unet_innermost_forward.1} parent=0 // pred_check
    _
  $region47: #{unet_innermost_forward.1} parent=0 // pred_check_branch
    %1726 = sbr.rel (0) target = $region49
  $region48: #{unet_innermost_forward.1} parent=0 // pred_region
    _
  $region49: #{unet_innermost_forward.1} parent=0 // pred_fallthru
    _

</llo_original>
